<compile_context>
chip_gen: v6e
topology: v6e:2x2x1
jax: 0.10.0
libtpu: 0.0.40
codegen_flags: <defaults>
</compile_context>

<pallas_src>
import functools

import jax
import jax.numpy as jnp
from jax.experimental import pallas as pl
from jax.experimental.pallas import tpu as pltpu

LEAKY_SLOPE = 0.01  # torch.nn.LeakyReLU default negative_slope


# --------------------------------------------------------------------------
# Parameter packing: run ONCE at parameter-load time, not per forward call.
# --------------------------------------------------------------------------
def pack_upsample_params(wt, bias, *, compute_dtype=jnp.bfloat16):
    """Pack torch ConvTranspose2d(k=4, stride=2, padding=1) params for the kernel.

    wt: (Cin, Cout, 4, 4) torch layout, bias: (Cout,).
    Returns
      wpack: (9, Cin, 4*Cout) in `compute_dtype`, tap-major; columns ordered (r, c, co)
      bpack: (1, 4*Cout) float32
    Derivation (validated against the dilate+correlate reference): output pixel
    (2a+r, 2b+c) reads the 1-padded input at rows a+r+dy, cols b+c+dx (dy,dx in {0,1})
    with kernel taps (kh, kw) = (3-r-2dy, 3-c-2dx).
    """
    Cin, Cout, k, _ = wt.shape
    assert k == 4, "sub-pixel packing implemented for kernel_size=4 (factor=2)"
    w6 = jnp.zeros((3, 3, Cin, 2, 2, Cout), wt.dtype)
    for r in range(2):
        for c in range(2):
            for dy in range(2):
                for dx in range(2):
                    kh = 3 - r - 2 * dy
                    kw = 3 - c - 2 * dx
                    w6 = w6.at[r + dy, c + dx, :, r, c, :].set(wt[:, :, kh, kw])
    wpack = w6.reshape(9, Cin, 4 * Cout).astype(compute_dtype)
    bpack = jnp.tile(bias.astype(jnp.float32), 4).reshape(1, 4 * Cout)
    return wpack, bpack


# --------------------------------------------------------------------------
# Pallas kernel: halo'd row strip -> 9 per-tap MXU dots -> bias + LeakyReLU
#                -> depth-to-space-ordered bf16 store
# --------------------------------------------------------------------------
def _upsample_subpixel_kernel(s_ref, w_ref, b_ref, o_ref):
    # s_ref: (TH+2, W+2, Cin)    compute dtype (bf16) -- halo'd NHWC input row strip
    # w_ref: (9, Cin, 4*Cout)    compute dtype        -- per-tap sub-pixel packed weights
    # b_ref: (1, 4*Cout)         float32
    # o_ref: (TH, 2, W, 2*Cout)  out dtype (bf16)     -- (row, r_phase, col, c_phase*Cout)
    th, _, w, two_cout = o_ref.shape
    cin = s_ref.shape[-1]
    n = w_ref.shape[-1]

    # 9 accumulating per-tap dots.  The op is HBM-bound at these channel counts, so
    # the MXU has huge slack; this avoids building a lane-concatenated 9*Cin patch
    # matrix (no extra relayouts, no HBM im2col).
    acc = jnp.zeros((th * w, n), jnp.float32)
    for t in range(9):
        ty, tx = t // 3, t % 3
        tap = s_ref[ty:ty + th, tx:tx + w, :].reshape(th * w, cin)
        acc = acc + jnp.dot(tap, w_ref[t], preferred_element_type=jnp.float32)

    z = acc + b_ref[...]                                   # bias in f32
    z = jnp.where(z >= 0, z, LEAKY_SLOPE * z)              # LeakyReLU in f32

    # Depth-to-space phase interleave stays in VMEM: store each row-phase slab.
    for r in range(2):
        zr = z[:, r * two_cout:(r + 1) * two_cout]          # columns = (c_phase, Cout)
        o_ref[:, r, :, :] = zr.reshape(th, w, two_cout).astype(o_ref.dtype)


def _choose_row_tile(B, H, W, Cin, *, itemsize=2, vmem_cap_bytes=4 * 1024 * 1024):
    """Pick TH | H: largest strip that fits a conservative VMEM budget, then split
    further (keeping >=8 rows) so the 1-D grid has >=4 steps (v7x has 2 TensorCores)."""
    divisors = [t for t in range(H, 0, -1) if H % t == 0]
    th = divisors[-1]
    for t in divisors:
        if (t + 2) * (W + 2) * Cin * itemsize <= vmem_cap_bytes:
            th = t
            break
    for t in divisors:
        if t <= th and t >= 8 and B * (H // t) >= 4:
            th = t
            break
    return th


# --------------------------------------------------------------------------
# UpsampleBlock forward (NCHW in / NCHW out, matching the torch module)
# --------------------------------------------------------------------------
def upsample_block_forward(x_nchw, wpack, bpack, *, factor=2,
                           compute_dtype=jnp.bfloat16, out_dtype=jnp.bfloat16):
    """ConvTranspose2d(C->C, k=2*factor, stride=factor, padding=factor//2) + LeakyReLU.

    x_nchw: (B, Cin, H, W); wpack/bpack from `pack_upsample_params`.
    Returns (B, Cout, 2H, 2W) in `out_dtype` (bf16 keeps the 4x-larger activation
    stream half-width; pass jnp.float32 for strict dtype parity with torch).
    """
    # TODO(synk): only factor == 2 (the module default and the only factor used by the
    # surrounding UNet) is implemented; other factors need a generalized phase mapping.
    assert factor == 2
    B, Cin, H, W = x_nchw.shape
    assert wpack.shape[0] == 9 and wpack.shape[1] == Cin
    Cout = wpack.shape[2] // 4

    # NCHW -> NHWC and cast to bf16 BEFORE padding / strip construction so every
    # downstream input byte is half-width.
    # TODO(synk): keep the surrounding UNet in NHWC to drop this and the final transpose.
    x = jnp.transpose(x_nchw, (0, 2, 3, 1)).astype(compute_dtype)
    xp = jnp.pad(x, ((0, 0), (1, 1), (1, 1), (0, 0)))       # 1-pixel zero halo

    TH = _choose_row_tile(B, H, W, Cin, itemsize=jnp.dtype(compute_dtype).itemsize)
    nrt = H // TH
    if nrt == 1:
        strips = xp[:, None]                                 # free view, no duplication
    else:
        # Overlapping halo'd row strips: (TH+2)/TH <= 1.25x duplication (vs 9x for an
        # HBM im2col); plain Blocked specs then pipeline them with no manual DMA.
        strips = jnp.stack([xp[:, i * TH:i * TH + TH + 2] for i in range(nrt)], axis=1)
    strips = strips.reshape(B * nrt, TH + 2, W + 2, Cin)

    G = B * nrt
    Np = 4 * Cout
    cbytes = jnp.dtype(compute_dtype).itemsize
    obytes = jnp.dtype(out_dtype).itemsize
    cost = pl.CostEstimate(
        flops=2 * G * TH * W * 9 * Cin * Np,
        transcendentals=0,
        bytes_accessed=(strips.size + wpack.size) * cbytes + bpack.size * 4
        + G * TH * 2 * W * 2 * Cout * obytes,
    )

    out = pl.pallas_call(
        _upsample_subpixel_kernel,
        out_shape=jax.ShapeDtypeStruct((G, TH, 2, W, 2 * Cout), out_dtype),
        grid=(G,),
        in_specs=[
            pl.BlockSpec((None, TH + 2, W + 2, Cin), lambda i: (i, 0, 0, 0)),
            pl.BlockSpec((9, Cin, Np), lambda i: (0, 0, 0)),   # constant -> fetched once
            pl.BlockSpec((1, Np), lambda i: (0, 0)),           # constant -> fetched once
        ],
        out_specs=pl.BlockSpec((None, TH, 2, W, 2 * Cout), lambda i: (i, 0, 0, 0, 0)),
        compiler_params=pltpu.CompilerParams(dimension_semantics=("parallel",)),
        cost_estimate=cost,
    )(strips, wpack.astype(compute_dtype), bpack)

    # Free, contiguous depth-to-space: (B*nrt, TH, 2, W, 2, Cout) -> (B, 2H, 2W, Cout).
    y = out.reshape(B, 2 * H, 2 * W, Cout)
    return jnp.transpose(y, (0, 3, 1, 2))                    # back to NCHW for parity


# --------------------------------------------------------------------------
# Pure-JAX reference (dilate + flipped-kernel correlation), for validation
# --------------------------------------------------------------------------
def upsample_ref(x_nchw, wt, bias, *, factor=2, quant_dtype=None):
    B, Cin, H, W = x_nchw.shape
    Cout = wt.shape[1]
    k, s, p = 2 * factor, factor, factor // 2
    x = x_nchw
    w = wt
    if quant_dtype is not None:   # mimic the kernel's bf16 input/weight cast exactly
        x = x.astype(quant_dtype).astype(jnp.float32)
        w = w.astype(quant_dtype).astype(jnp.float32)
    xd = jnp.zeros((B, Cin, (H - 1) * s + 1, (W - 1) * s + 1), jnp.float32)
    xd = xd.at[:, :, ::s, ::s].set(x)
    e = k - 1 - p
    xpad = jnp.pad(xd, ((0, 0), (0, 0), (e, e), (e, e)))
    Ho = (H - 1) * s - 2 * p + k
    Wo = (W - 1) * s - 2 * p + k
    wf = w[:, :, ::-1, ::-1]
    y = jnp.zeros((B, Cout, Ho, Wo), jnp.float32) + bias.reshape(1, Cout, 1, 1)
    for dy in range(k):
        for dx in range(k):
            y = y + jnp.einsum("bcij,cd->bdij",
                               xpad[:, :, dy:dy + Ho, dx:dx + Wo], wf[:, :, dy, dx])
    return jnp.where(y >= 0, y, LEAKY_SLOPE * y)


# --------------------------------------------------------------------------
if __name__ == "__main__":
    B, C, H, W = 2, 16, 16, 16
    factor = 2
    k = 2 * factor

    key = jax.random.PRNGKey(0)
    kx, kw, kb = jax.random.split(key, 3)
    x = jax.random.normal(kx, (B, C, H, W), jnp.float32)
    # torch ConvTranspose2d weight layout: (in_channels, out_channels, kH, kW)
    wt = jax.random.normal(kw, (C, C, k, k), jnp.float32) / jnp.sqrt(float(C * k * k))
    bias = 0.01 * jax.random.normal(kb, (C,), jnp.float32)

    # Pack / cast the parameters once (parameter-load time), outside the jitted forward.
    wpack, bpack = pack_upsample_params(wt, bias)

    fwd = jax.jit(functools.partial(upsample_block_forward, factor=factor))
    y = jax.block_until_ready(fwd(x, wpack, bpack))

    assert y.shape == (B, C, 2 * H, 2 * W), y.shape
    yf = y.astype(jnp.float32)
    assert bool(jnp.all(jnp.isfinite(yf)))

    # Structural check: reference with the same bf16 input/weight quantization; the
    # only remaining difference is the kernel's bf16 output rounding.
    y_ref_q = upsample_ref(x, wt, bias, factor=factor, quant_dtype=jnp.bfloat16)
    err_q = float(jnp.max(jnp.abs(yf - y_ref_q)))
    assert err_q < 3e-2, f"mismatch vs bf16-quantized reference: {err_q}"

    # Loose check vs the full-f32 reference (bf16 compute/output is the only difference).
    y_ref = upsample_ref(x, wt, bias, factor=factor)
    err_f32 = float(jnp.max(jnp.abs(yf - y_ref)))
    assert err_f32 < 1.5e-1, f"bf16 deviation from f32 reference too large: {err_f32}"

    print("KERNEL_OK")
</pallas_src>

<mosaic_0001>
module attributes {stable_mosaic.version = 11 : i64} {
  func.func @_upsample_subpixel_kernel(%arg0: i32, %arg1: memref<1x10x18x16xbf16, #tpu.memory_space<vmem>>, %arg2: memref<9x16x64xbf16, #tpu.memory_space<vmem>>, %arg3: memref<1x64xf32, #tpu.memory_space<vmem>>, %arg4: memref<1x8x2x16x32xbf16, #tpu.memory_space<vmem>>) attributes {dimension_semantics = [#tpu.dimension_semantics<parallel>], iteration_bounds = array<i64: 4>, scalar_prefetch = 0 : i64, scratch_operands = 0 : i64, tpu.core_type = #tpu.core_type<tc>, window_params = [{transform_indices = @transform_0, window_bounds = array<i64: 1, 10, 18, 16>}, {pipeline_mode = #tpu.pipeline_mode<synchronous>, transform_indices = @transform_1, window_bounds = array<i64: 9, 16, 64>}, {pipeline_mode = #tpu.pipeline_mode<synchronous>, transform_indices = @transform_2, window_bounds = array<i64: 1, 64>}, {transform_indices = @transform_3, window_bounds = array<i64: 1, 8, 2, 16, 32>}]} {
    %cst = arith.constant 0.000000e+00 : f32
    %0 = vector.broadcast %cst : f32 to vector<128x64xf32>
    %c0 = arith.constant 0 : index
    %c0_0 = arith.constant 0 : index
    %c0_1 = arith.constant 0 : index
    %c0_2 = arith.constant 0 : index
    %1 = vector.load %arg1[%c0, %c0_0, %c0_1, %c0_2] : memref<1x10x18x16xbf16, #tpu.memory_space<vmem>>, vector<1x8x16x16xbf16>
    %2 = vector.shape_cast %1 : vector<1x8x16x16xbf16> to vector<8x16x16xbf16>
    %3 = vector.shape_cast %2 : vector<8x16x16xbf16> to vector<128x16xbf16>
    %c0_3 = arith.constant 0 : index
    %c0_4 = arith.constant 0 : index
    %c0_5 = arith.constant 0 : index
    %4 = vector.load %arg2[%c0_3, %c0_4, %c0_5] : memref<9x16x64xbf16, #tpu.memory_space<vmem>>, vector<1x16x64xbf16>
    %5 = vector.shape_cast %4 : vector<1x16x64xbf16> to vector<16x64xbf16>
    %cst_6 = arith.constant dense<0.000000e+00> : vector<128x64xf32>
    %6 = tpu.matmul %3, %5, %cst_6 {dimension_numbers = #tpu.dot_dimension_numbers<[1], [0], [0], [1], [0, 0, 1, 1], [], []>} : vector<128x16xbf16>, vector<16x64xbf16>, vector<128x64xf32> -> vector<128x64xf32>
    %7 = arith.addf %0, %6 : vector<128x64xf32>
    %c0_7 = arith.constant 0 : index
    %c0_8 = arith.constant 0 : index
    %c1 = arith.constant 1 : index
    %c0_9 = arith.constant 0 : index
    %8 = vector.load %arg1[%c0_7, %c0_8, %c1, %c0_9] : memref<1x10x18x16xbf16, #tpu.memory_space<vmem>>, vector<1x8x16x16xbf16>
    %9 = vector.shape_cast %8 : vector<1x8x16x16xbf16> to vector<8x16x16xbf16>
    %10 = vector.shape_cast %9 : vector<8x16x16xbf16> to vector<128x16xbf16>
    %c1_10 = arith.constant 1 : index
    %c0_11 = arith.constant 0 : index
    %c0_12 = arith.constant 0 : index
    %11 = vector.load %arg2[%c1_10, %c0_11, %c0_12] : memref<9x16x64xbf16, #tpu.memory_space<vmem>>, vector<1x16x64xbf16>
    %12 = vector.shape_cast %11 : vector<1x16x64xbf16> to vector<16x64xbf16>
    %cst_13 = arith.constant dense<0.000000e+00> : vector<128x64xf32>
    %13 = tpu.matmul %10, %12, %cst_13 {dimension_numbers = #tpu.dot_dimension_numbers<[1], [0], [0], [1], [0, 0, 1, 1], [], []>} : vector<128x16xbf16>, vector<16x64xbf16>, vector<128x64xf32> -> vector<128x64xf32>
    %14 = arith.addf %7, %13 : vector<128x64xf32>
    %c0_14 = arith.constant 0 : index
    %c0_15 = arith.constant 0 : index
    %c2 = arith.constant 2 : index
    %c0_16 = arith.constant 0 : index
    %15 = vector.load %arg1[%c0_14, %c0_15, %c2, %c0_16] : memref<1x10x18x16xbf16, #tpu.memory_space<vmem>>, vector<1x8x16x16xbf16>
    %16 = vector.shape_cast %15 : vector<1x8x16x16xbf16> to vector<8x16x16xbf16>
    %17 = vector.shape_cast %16 : vector<8x16x16xbf16> to vector<128x16xbf16>
    %c2_17 = arith.constant 2 : index
    %c0_18 = arith.constant 0 : index
    %c0_19 = arith.constant 0 : index
    %18 = vector.load %arg2[%c2_17, %c0_18, %c0_19] : memref<9x16x64xbf16, #tpu.memory_space<vmem>>, vector<1x16x64xbf16>
    %19 = vector.shape_cast %18 : vector<1x16x64xbf16> to vector<16x64xbf16>
    %cst_20 = arith.constant dense<0.000000e+00> : vector<128x64xf32>
    %20 = tpu.matmul %17, %19, %cst_20 {dimension_numbers = #tpu.dot_dimension_numbers<[1], [0], [0], [1], [0, 0, 1, 1], [], []>} : vector<128x16xbf16>, vector<16x64xbf16>, vector<128x64xf32> -> vector<128x64xf32>
    %21 = arith.addf %14, %20 : vector<128x64xf32>
    %c0_21 = arith.constant 0 : index
    %c1_22 = arith.constant 1 : index
    %c0_23 = arith.constant 0 : index
    %c0_24 = arith.constant 0 : index
    %22 = vector.load %arg1[%c0_21, %c1_22, %c0_23, %c0_24] : memref<1x10x18x16xbf16, #tpu.memory_space<vmem>>, vector<1x8x16x16xbf16>
    %23 = vector.shape_cast %22 : vector<1x8x16x16xbf16> to vector<8x16x16xbf16>
    %24 = vector.shape_cast %23 : vector<8x16x16xbf16> to vector<128x16xbf16>
    %c3 = arith.constant 3 : index
    %c0_25 = arith.constant 0 : index
    %c0_26 = arith.constant 0 : index
    %25 = vector.load %arg2[%c3, %c0_25, %c0_26] : memref<9x16x64xbf16, #tpu.memory_space<vmem>>, vector<1x16x64xbf16>
    %26 = vector.shape_cast %25 : vector<1x16x64xbf16> to vector<16x64xbf16>
    %cst_27 = arith.constant dense<0.000000e+00> : vector<128x64xf32>
    %27 = tpu.matmul %24, %26, %cst_27 {dimension_numbers = #tpu.dot_dimension_numbers<[1], [0], [0], [1], [0, 0, 1, 1], [], []>} : vector<128x16xbf16>, vector<16x64xbf16>, vector<128x64xf32> -> vector<128x64xf32>
    %28 = arith.addf %21, %27 : vector<128x64xf32>
    %c0_28 = arith.constant 0 : index
    %c1_29 = arith.constant 1 : index
    %c1_30 = arith.constant 1 : index
    %c0_31 = arith.constant 0 : index
    %29 = vector.load %arg1[%c0_28, %c1_29, %c1_30, %c0_31] : memref<1x10x18x16xbf16, #tpu.memory_space<vmem>>, vector<1x8x16x16xbf16>
    %30 = vector.shape_cast %29 : vector<1x8x16x16xbf16> to vector<8x16x16xbf16>
    %31 = vector.shape_cast %30 : vector<8x16x16xbf16> to vector<128x16xbf16>
    %c4 = arith.constant 4 : index
    %c0_32 = arith.constant 0 : index
    %c0_33 = arith.constant 0 : index
    %32 = vector.load %arg2[%c4, %c0_32, %c0_33] : memref<9x16x64xbf16, #tpu.memory_space<vmem>>, vector<1x16x64xbf16>
    %33 = vector.shape_cast %32 : vector<1x16x64xbf16> to vector<16x64xbf16>
    %cst_34 = arith.constant dense<0.000000e+00> : vector<128x64xf32>
    %34 = tpu.matmul %31, %33, %cst_34 {dimension_numbers = #tpu.dot_dimension_numbers<[1], [0], [0], [1], [0, 0, 1, 1], [], []>} : vector<128x16xbf16>, vector<16x64xbf16>, vector<128x64xf32> -> vector<128x64xf32>
    %35 = arith.addf %28, %34 : vector<128x64xf32>
    %c0_35 = arith.constant 0 : index
    %c1_36 = arith.constant 1 : index
    %c2_37 = arith.constant 2 : index
    %c0_38 = arith.constant 0 : index
    %36 = vector.load %arg1[%c0_35, %c1_36, %c2_37, %c0_38] : memref<1x10x18x16xbf16, #tpu.memory_space<vmem>>, vector<1x8x16x16xbf16>
    %37 = vector.shape_cast %36 : vector<1x8x16x16xbf16> to vector<8x16x16xbf16>
    %38 = vector.shape_cast %37 : vector<8x16x16xbf16> to vector<128x16xbf16>
    %c5 = arith.constant 5 : index
    %c0_39 = arith.constant 0 : index
    %c0_40 = arith.constant 0 : index
    %39 = vector.load %arg2[%c5, %c0_39, %c0_40] : memref<9x16x64xbf16, #tpu.memory_space<vmem>>, vector<1x16x64xbf16>
    %40 = vector.shape_cast %39 : vector<1x16x64xbf16> to vector<16x64xbf16>
    %cst_41 = arith.constant dense<0.000000e+00> : vector<128x64xf32>
    %41 = tpu.matmul %38, %40, %cst_41 {dimension_numbers = #tpu.dot_dimension_numbers<[1], [0], [0], [1], [0, 0, 1, 1], [], []>} : vector<128x16xbf16>, vector<16x64xbf16>, vector<128x64xf32> -> vector<128x64xf32>
    %42 = arith.addf %35, %41 : vector<128x64xf32>
    %c0_42 = arith.constant 0 : index
    %c2_43 = arith.constant 2 : index
    %c0_44 = arith.constant 0 : index
    %c0_45 = arith.constant 0 : index
    %43 = vector.load %arg1[%c0_42, %c2_43, %c0_44, %c0_45] : memref<1x10x18x16xbf16, #tpu.memory_space<vmem>>, vector<1x8x16x16xbf16>
    %44 = vector.shape_cast %43 : vector<1x8x16x16xbf16> to vector<8x16x16xbf16>
    %45 = vector.shape_cast %44 : vector<8x16x16xbf16> to vector<128x16xbf16>
    %c6 = arith.constant 6 : index
    %c0_46 = arith.constant 0 : index
    %c0_47 = arith.constant 0 : index
    %46 = vector.load %arg2[%c6, %c0_46, %c0_47] : memref<9x16x64xbf16, #tpu.memory_space<vmem>>, vector<1x16x64xbf16>
    %47 = vector.shape_cast %46 : vector<1x16x64xbf16> to vector<16x64xbf16>
    %cst_48 = arith.constant dense<0.000000e+00> : vector<128x64xf32>
    %48 = tpu.matmul %45, %47, %cst_48 {dimension_numbers = #tpu.dot_dimension_numbers<[1], [0], [0], [1], [0, 0, 1, 1], [], []>} : vector<128x16xbf16>, vector<16x64xbf16>, vector<128x64xf32> -> vector<128x64xf32>
    %49 = arith.addf %42, %48 : vector<128x64xf32>
    %c0_49 = arith.constant 0 : index
    %c2_50 = arith.constant 2 : index
    %c1_51 = arith.constant 1 : index
    %c0_52 = arith.constant 0 : index
    %50 = vector.load %arg1[%c0_49, %c2_50, %c1_51, %c0_52] : memref<1x10x18x16xbf16, #tpu.memory_space<vmem>>, vector<1x8x16x16xbf16>
    %51 = vector.shape_cast %50 : vector<1x8x16x16xbf16> to vector<8x16x16xbf16>
    %52 = vector.shape_cast %51 : vector<8x16x16xbf16> to vector<128x16xbf16>
    %c7 = arith.constant 7 : index
    %c0_53 = arith.constant 0 : index
    %c0_54 = arith.constant 0 : index
    %53 = vector.load %arg2[%c7, %c0_53, %c0_54] : memref<9x16x64xbf16, #tpu.memory_space<vmem>>, vector<1x16x64xbf16>
    %54 = vector.shape_cast %53 : vector<1x16x64xbf16> to vector<16x64xbf16>
    %cst_55 = arith.constant dense<0.000000e+00> : vector<128x64xf32>
    %55 = tpu.matmul %52, %54, %cst_55 {dimension_numbers = #tpu.dot_dimension_numbers<[1], [0], [0], [1], [0, 0, 1, 1], [], []>} : vector<128x16xbf16>, vector<16x64xbf16>, vector<128x64xf32> -> vector<128x64xf32>
    %56 = arith.addf %49, %55 : vector<128x64xf32>
    %c0_56 = arith.constant 0 : index
    %c2_57 = arith.constant 2 : index
    %c2_58 = arith.constant 2 : index
    %c0_59 = arith.constant 0 : index
    %57 = vector.load %arg1[%c0_56, %c2_57, %c2_58, %c0_59] : memref<1x10x18x16xbf16, #tpu.memory_space<vmem>>, vector<1x8x16x16xbf16>
    %58 = vector.shape_cast %57 : vector<1x8x16x16xbf16> to vector<8x16x16xbf16>
    %59 = vector.shape_cast %58 : vector<8x16x16xbf16> to vector<128x16xbf16>
    %c8 = arith.constant 8 : index
    %c0_60 = arith.constant 0 : index
    %c0_61 = arith.constant 0 : index
    %60 = vector.load %arg2[%c8, %c0_60, %c0_61] : memref<9x16x64xbf16, #tpu.memory_space<vmem>>, vector<1x16x64xbf16>
    %61 = vector.shape_cast %60 : vector<1x16x64xbf16> to vector<16x64xbf16>
    %cst_62 = arith.constant dense<0.000000e+00> : vector<128x64xf32>
    %62 = tpu.matmul %59, %61, %cst_62 {dimension_numbers = #tpu.dot_dimension_numbers<[1], [0], [0], [1], [0, 0, 1, 1], [], []>} : vector<128x16xbf16>, vector<16x64xbf16>, vector<128x64xf32> -> vector<128x64xf32>
    %63 = arith.addf %56, %62 : vector<128x64xf32>
    %c0_63 = arith.constant 0 : index
    %c0_64 = arith.constant 0 : index
    %64 = vector.load %arg3[%c0_63, %c0_64] : memref<1x64xf32, #tpu.memory_space<vmem>>, vector<1x64xf32>
    %65 = vector.broadcast %64 : vector<1x64xf32> to vector<128x64xf32>
    %66 = arith.addf %63, %65 : vector<128x64xf32>
    %cst_65 = arith.constant 0.000000e+00 : f32
    %67 = vector.broadcast %cst_65 : f32 to vector<128x64xf32>
    %68 = arith.cmpf oge, %66, %67 : vector<128x64xf32>
    %cst_66 = arith.constant 0.00999999977 : f32
    %69 = vector.broadcast %cst_66 : f32 to vector<128x64xf32>
    %70 = arith.mulf %69, %66 : vector<128x64xf32>
    %71 = arith.select %68, %66, %70 : vector<128x64xi1>, vector<128x64xf32>
    %72 = vector.extract_strided_slice %71 {offsets = [0, 0], sizes = [128, 32], strides = [1, 1]} : vector<128x64xf32> to vector<128x32xf32>
    %73 = vector.shape_cast %72 : vector<128x32xf32> to vector<8x16x32xf32>
    %74 = arith.truncf %73 : vector<8x16x32xf32> to vector<8x16x32xbf16>
    %c0_67 = arith.constant 0 : index
    %c0_68 = arith.constant 0 : index
    %c0_69 = arith.constant 0 : index
    %c0_70 = arith.constant 0 : index
    %c0_71 = arith.constant 0 : index
    %75 = vector.load %arg4[%c0_67, %c0_68, %c0_69, %c0_70, %c0_71] : memref<1x8x2x16x32xbf16, #tpu.memory_space<vmem>>, vector<1x8x1x16x32xbf16>
    %76 = vector.shape_cast %75 : vector<1x8x1x16x32xbf16> to vector<8x16x32xbf16>
    %77 = vector.shape_cast %74 : vector<8x16x32xbf16> to vector<1x8x1x16x32xbf16>
    tpu.vector_store %arg4[%c0_67, %c0_68, %c0_69, %c0_70, %c0_71], %77 {strides = array<i32>} : memref<1x8x2x16x32xbf16, #tpu.memory_space<vmem>>, vector<1x8x1x16x32xbf16>,
    %78 = vector.extract_strided_slice %71 {offsets = [0, 32], sizes = [128, 32], strides = [1, 1]} : vector<128x64xf32> to vector<128x32xf32>
    %79 = vector.shape_cast %78 : vector<128x32xf32> to vector<8x16x32xf32>
    %80 = arith.truncf %79 : vector<8x16x32xf32> to vector<8x16x32xbf16>
    %c0_72 = arith.constant 0 : index
    %c0_73 = arith.constant 0 : index
    %c1_74 = arith.constant 1 : index
    %c0_75 = arith.constant 0 : index
    %c0_76 = arith.constant 0 : index
    %81 = vector.load %arg4[%c0_72, %c0_73, %c1_74, %c0_75, %c0_76] : memref<1x8x2x16x32xbf16, #tpu.memory_space<vmem>>, vector<1x8x1x16x32xbf16>
    %82 = vector.shape_cast %81 : vector<1x8x1x16x32xbf16> to vector<8x16x32xbf16>
    %83 = vector.shape_cast %80 : vector<8x16x32xbf16> to vector<1x8x1x16x32xbf16>
    tpu.vector_store %arg4[%c0_72, %c0_73, %c1_74, %c0_75, %c0_76], %83 {strides = array<i32>} : memref<1x8x2x16x32xbf16, #tpu.memory_space<vmem>>, vector<1x8x1x16x32xbf16>,
    return
  }
  func.func @transform_0(%arg0: i32) -> (i32, i32, i32, i32) {
    %c0_i32 = arith.constant 0 : i32
    %c0_i32_0 = arith.constant 0 : i32
    %c0_i32_1 = arith.constant 0 : i32
    %c0_i32_2 = arith.constant 0 : i32
    return %arg0, %c0_i32, %c0_i32_0, %c0_i32_1 : i32, i32, i32, i32
  }
  func.func @transform_1(%arg0: i32) -> (i32, i32, i32) {
    %c0_i32 = arith.constant 0 : i32
    %c0_i32_0 = arith.constant 0 : i32
    %c0_i32_1 = arith.constant 0 : i32
    %c0_i32_2 = arith.constant 0 : i32
    return %c0_i32, %c0_i32_0, %c0_i32_1 : i32, i32, i32
  }
  func.func @transform_2(%arg0: i32) -> (i32, i32) {
    %c0_i32 = arith.constant 0 : i32
    %c0_i32_0 = arith.constant 0 : i32
    %c0_i32_1 = arith.constant 0 : i32
    return %c0_i32, %c0_i32_0 : i32, i32
  }
  func.func @transform_3(%arg0: i32) -> (i32, i32, i32, i32, i32) {
    %c0_i32 = arith.constant 0 : i32
    %c0_i32_0 = arith.constant 0 : i32
    %c0_i32_1 = arith.constant 0 : i32
    %c0_i32_2 = arith.constant 0 : i32
    %c0_i32_3 = arith.constant 0 : i32
    return %arg0, %c0_i32, %c0_i32_0, %c0_i32_1, %c0_i32_2 : i32, i32, i32, i32, i32
  }
}

</mosaic_0001>

<llo_original>
// kernel: upsample_block_forward.1
$region0: #{upsample_block_forward.1}
  #allocation0 [shape = 'u32[]', space=smem, size = 0x4, offset = 0x4, fixed_abs, tag = 'smem constant byte address 0x4 - core index']
  #allocation1 [shape = 'u32[144,128]{1,0:T(1,128)}', space=vmem, size = 0x12000, scoped, tag = 'internal scratch']
  %s0 = inlined_call_operand.vmem [shape: bf16[4,10,18,16], index: 0, kind: input, shape index: {}]
  %s1 = inlined_call_operand.vmem [shape: bf16[9,16,64], index: 1, kind: input, shape index: {}]
  %s2 = inlined_call_operand.vmem [shape: f32[1,64], index: 2, kind: input, shape index: {}]
  %s3 = inlined_call_operand.vmem [shape: bf16[4,8,2,16,32], index: 3, kind: output, shape index: {}]
  %s4 = sld [smem:[#allocation0]]
  $region45: #{upsample_block_forward.1} parent=0
    _
  %s6 = ssub.s32 1, %s4
  %s7 = scalar_select 0, %s6, %s4
  loop: start=0, step=1, limit=6
  $region2: #{upsample_block_forward.1} parent=0 // loop_pre_header
    _
  $region3: #{upsample_block_forward.1} parent=0 // loop_header
    %s9 = sphi 0, %s13
    %p10 = scmp.ge.s32.totalorder %s9, 6
    %s19 = sphi 0, %s21
    %s22 = sphi 0, %s19
    %s23 = sphi 0, %s22
    %s39 = sphi 0, %s23
    %s43 = sphi 0, %s43
    %s45 = sphi 0, %s43
    %s46 = sphi 0, %s45
    %s60 = sphi 0, %s46
    %s64 = sphi 0, %s64
    %s66 = sphi 0, %s64
    %s67 = sphi 0, %s66
    %s81 = sphi 0, %s67
    %s87 = sphi 0, %s89
    %s90 = sphi 0, %s87
    %s91 = sphi 0, %s90
    %s107 = sphi 0, %s91
  $region4: #{upsample_block_forward.1} parent=0 // loop_header_branch
    %12 = sbr.rel (%p10) target = $region8
  $region5: #{upsample_block_forward.1} parent=0 // loop_body
    %s14 = ssub.s32 %s9, 1
    %s15 = ssub.s32 %s9, 2
    %s16 = sadd.s32 %s9, 1
    %s17 = ssub.s32 %s9, %s16
    %p18 = scmp.eq.s32.totalorder %s17, 0
    %s20 = sadd.s32 %s19, 1
    %s21 = scalar_select %p18, %s19, %s20
    %p24 = pneg %p18
    %p25 = scmp.eq.s32.totalorder %s9, 3
    %p26 = por %p24, %p25
    %p27 = scmp.ne.s32.totalorder %s19, %s22
    %p28 = scmp.eq.s32.totalorder %s9, 0
    %p29 = por %p27, %p28
    %p30 = scmp.ne.s32.totalorder %s19, %s22
    %p31 = scmp.eq.s32.totalorder %s14, 3
    %p32 = por %p30, %p31
    %p33 = scmp.ne.s32.totalorder %s22, %s23
    %p34 = scmp.eq.s32.totalorder %s14, 0
    %p35 = por %p33, %p34
    %p36 = scmp.ne.s32.totalorder %s22, %s23
    %p37 = scmp.eq.s32.totalorder %s15, 3
    %p38 = por %p36, %p37
    %p40 = scmp.ne.s32.totalorder %s23, %s39
    %p41 = scmp.eq.s32.totalorder %s15, 0
    %p42 = por %p40, %p41
    %s44 = sadd.s32 %s43, 1
    %p47 = scmp.eq.s32.totalorder %s9, 3
    %p48 = scmp.ne.s32.totalorder %s43, %s45
    %p49 = scmp.eq.s32.totalorder %s9, 0
    %p50 = por %p48, %p49
    %p51 = scmp.ne.s32.totalorder %s43, %s45
    %p52 = scmp.eq.s32.totalorder %s14, 3
    %p53 = por %p51, %p52
    %p54 = scmp.ne.s32.totalorder %s45, %s46
    %p55 = scmp.eq.s32.totalorder %s14, 0
    %p56 = por %p54, %p55
    %p57 = scmp.ne.s32.totalorder %s45, %s46
    %p58 = scmp.eq.s32.totalorder %s15, 3
    %p59 = por %p57, %p58
    %p61 = scmp.ne.s32.totalorder %s46, %s60
    %p62 = scmp.eq.s32.totalorder %s15, 0
    %p63 = por %p61, %p62
    %s65 = sadd.s32 %s64, 1
    %p68 = scmp.eq.s32.totalorder %s9, 3
    %p69 = scmp.ne.s32.totalorder %s64, %s66
    %p70 = scmp.eq.s32.totalorder %s9, 0
    %p71 = por %p69, %p70
    %p72 = scmp.ne.s32.totalorder %s64, %s66
    %p73 = scmp.eq.s32.totalorder %s14, 3
    %p74 = por %p72, %p73
    %p75 = scmp.ne.s32.totalorder %s66, %s67
    %p76 = scmp.eq.s32.totalorder %s14, 0
    %p77 = por %p75, %p76
    %p78 = scmp.ne.s32.totalorder %s66, %s67
    %p79 = scmp.eq.s32.totalorder %s15, 3
    %p80 = por %p78, %p79
    %p82 = scmp.ne.s32.totalorder %s67, %s81
    %p83 = scmp.eq.s32.totalorder %s15, 0
    %p84 = por %p82, %p83
    %s85 = ssub.s32 %s9, %s16
    %p86 = scmp.eq.s32.totalorder %s85, 0
    %s88 = sadd.s32 %s87, 1
    %s89 = scalar_select %p86, %s87, %s88
    %p92 = pneg %p86
    %p93 = scmp.eq.s32.totalorder %s9, 3
    %p94 = por %p92, %p93
    %p95 = scmp.ne.s32.totalorder %s87, %s90
    %p96 = scmp.eq.s32.totalorder %s9, 0
    %p97 = por %p95, %p96
    %p98 = scmp.ne.s32.totalorder %s87, %s90
    %p99 = scmp.eq.s32.totalorder %s14, 3
    %p100 = por %p98, %p99
    %p101 = scmp.ne.s32.totalorder %s90, %s91
    %p102 = scmp.eq.s32.totalorder %s14, 0
    %p103 = por %p101, %p102
    %p104 = scmp.ne.s32.totalorder %s90, %s91
    %p105 = scmp.eq.s32.totalorder %s15, 3
    %p106 = por %p104, %p105
    %p108 = scmp.ne.s32.totalorder %s91, %s107
    %p109 = scmp.eq.s32.totalorder %s15, 0
    %p110 = por %p108, %p109
    %p111 = scmp.le.s32.totalorder 1, %s9
    %p112 = scmp.lt.s32.totalorder %s9, 5
    %p113 = pnand %p111, %p112
    %p114 = pneg %p113
    // Predicated region
    $region9: #{upsample_block_forward.1} parent=5 // pred_check
      _
    $region10: #{upsample_block_forward.1} parent=5 // pred_check_branch
      %116 = sbr.rel (%p113) target = $region12
    $region11: #{upsample_block_forward.1} parent=5 // pred_region
      %s117 = ssub.s32 %s9, 1
      // Predicated region
      $region13: #{upsample_block_forward.1} parent=11 // pred_check
        %p118 = pneg %p56
      $region14: #{upsample_block_forward.1} parent=11 // pred_check_branch
        %120 = sbr.rel (%p118) target = $region16
      $region15: #{upsample_block_forward.1} parent=11 // pred_region
        _
      $region16: #{upsample_block_forward.1} parent=11 // pred_fallthru
        _
      // Predicated region
      $region17: #{upsample_block_forward.1} parent=11 // pred_check
        %p121 = pneg %p77
      $region18: #{upsample_block_forward.1} parent=11 // pred_check_branch
        %123 = sbr.rel (%p121) target = $region20
      $region19: #{upsample_block_forward.1} parent=11 // pred_region
        _
      $region20: #{upsample_block_forward.1} parent=11 // pred_fallthru
        _
    $region12: #{upsample_block_forward.1} parent=5 // pred_fallthru
      _
    %p124 = scmp.lt.s32.totalorder %s9, 4
    // Predicated region
    $region21: #{upsample_block_forward.1} parent=5 // pred_check
      %p125 = pneg %p124
    $region22: #{upsample_block_forward.1} parent=5 // pred_check_branch
      %127 = sbr.rel (%p125) target = $region24
    $region23: #{upsample_block_forward.1} parent=5 // pred_region
      // Predicated region
      $region25: #{upsample_block_forward.1} parent=23 // pred_check
        %p128 = pneg %p29
      $region26: #{upsample_block_forward.1} parent=23 // pred_check_branch
        %130 = sbr.rel (%p128) target = $region28
      $region27: #{upsample_block_forward.1} parent=23 // pred_region
        %p131 = scmp.lt.s32.totalorder %s9, 3
        %s132 = scalar_select %p131, %s9, 3
        %s133 = smul.addr %s132, 30
        %s134 = smul.addr %s133, 4
        %s135 = scalar_lea.vmem %s0, %s134
      $region28: #{upsample_block_forward.1} parent=23 // pred_fallthru
        _
    $region24: #{upsample_block_forward.1} parent=5 // pred_fallthru
      _
    %p136 = scmp.le.s32.totalorder 1, %s9
    %p137 = scmp.lt.s32.totalorder %s9, 5
    %p138 = pnand %p136, %p137
    %p139 = pneg %p138
    // Predicated region
    $region29: #{upsample_block_forward.1} parent=5 // pred_check
      _
    $region30: #{upsample_block_forward.1} parent=5 // pred_check_branch
      %141 = sbr.rel (%p138) target = $region32
    $region31: #{upsample_block_forward.1} parent=5 // pred_region
      %s142 = ssub.s32 %s9, 1
      %p143 = scmp.lt.s32.totalorder %s14, 3
      %s144 = scalar_select %p143, %s14, 3
      %s145 = smul.addr %s144, 30
      %s146 = smul.addr %s145, 4
      %s147 = scalar_lea.vmem %s0, %s146
      %p148 = pneg %p35
      %p149 = pneg %p32
      %p150 = pneg %p56
      %p151 = pneg %p53
      %p152 = pneg %p77
      %p153 = pneg %p74
      %p154 = pneg %p103
      %p155 = pneg %p100
      %p156 = scmp.lt.s32.totalorder %s14, 3
      %s157 = scalar_select %p156, %s14, 3
      %s158 = smul.addr %s157, 32
      %s159 = smul.addr %s158, 4
      %s160 = scalar_lea.vmem %s3, %s159
      %p161 = scmp.lt.s32.totalorder %s14, 3
      %s162 = scalar_select %p161, %s14, 3
      %s163 = smul.addr %s162, 30
      %s164 = smul.addr %s163, 4
      %s165 = scalar_lea.vmem %s0, %s164
      %p166 = scmp.lt.s32.totalorder %s14, 3
      %s167 = scalar_select %p166, %s14, 3
      %s168 = smul.addr %s167, 32
      %s169 = smul.addr %s168, 4
      %s170 = scalar_lea.vmem %s3, %s169
      %v172 = vld [vmem:[%s165] sm:$0xf]
      %v173 = vld [vmem:[%s165 + $0x4] sm:$0xf]
      %v174 = vld [vmem:[%s165 + $0xc] sm:$0xf]
      %v175 = vld [vmem:[%s165 + $0x10] sm:$0xf]
      %v176 = vld [vmem:[%s165 + $0x18] sm:$0xf]
      %v177 = vld [vmem:[%s165 + $0x1c] sm:$0xf]
      %v178 = vld [vmem:[%s165 + $0x24] sm:$0xf]
      %v179 = vld [vmem:[%s165 + $0x28] sm:$0xf]
      %v180 = vld [vmem:[%s165 + $0x30] sm:$0xf]
      %v181 = vld [vmem:[%s165 + $0x34] sm:$0xf]
      %v182 = vld [vmem:[%s165 + $0x3c] sm:$0xf]
      %v183 = vld [vmem:[%s165 + $0x40] sm:$0xf]
      %v184 = vld [vmem:[%s165 + $0x48] sm:$0xf]
      %v185 = vld [vmem:[%s165 + $0x4c] sm:$0xf]
      %v186 = vld [vmem:[%s165 + $0x54] sm:$0xf]
      %v187 = vld [vmem:[%s165 + $0x58] sm:$0xf]
      %v188 = vld [vmem:[%s1] sm:$0xf]
      %v189 = vld [vmem:[%s1 + $0x4] sm:$0xf]
      %v190 = vld [vmem:[%s165 + $0x8] sm:$0x1]
      %v191 = vld [vmem:[%s165 + $0x14] sm:$0x1]
      %v192 = vld [vmem:[%s165 + $0x20] sm:$0x1]
      %v193 = vld [vmem:[%s165 + $0x2c] sm:$0x1]
      %v194 = vld [vmem:[%s165 + $0x38] sm:$0x1]
      %v195 = vld [vmem:[%s165 + $0x44] sm:$0x1]
      %v196 = vld [vmem:[%s165 + $0x50] sm:$0x1]
      %v197 = vld [vmem:[%s165 + $0x5c] sm:$0x1]
      %vm198 = vsmask.f32 3328
      %vm199 = vsmask.f32 7440
      %vm200 = vmor %vm198, %vm199
      %v202 = vshrl.u32 %v172, 16
      %v204 = vrot.slane %v202, 4
      %v205 = vshll.u32 %v172, 16
      %v207 = vrot.slane %v205, 5
      %v208 = vor.u32 %v204, %v207
      %v209 = vrot.slane %v208, 4
      %v211 = vshll.u32 %v173, 16
      %v213 = vrot.slane %v211, 5
      %v214 = vsel %vm200, %v209, %v213
      %v215 = vshrl.u32 %v173, 16
      %v217 = vrot.slane %v215, 4
      %v218 = vor.u32 %v217, %v213
      %v219 = vrot.slane %v218, 4
      %v221 = vshll.u32 %v190, 16
      %v223 = vrot.slane %v221, 5
      %v224 = vsel %vm200, %v219, %v223
      %v226 = vshrl.u32 %v174, 16
      %v228 = vrot.slane %v226, 4
      %v229 = vshll.u32 %v174, 16
      %v231 = vrot.slane %v229, 5
      %v232 = vor.u32 %v228, %v231
      %v233 = vrot.slane %v232, 4
      %v235 = vshll.u32 %v175, 16
      %v237 = vrot.slane %v235, 5
      %v238 = vsel %vm200, %v233, %v237
      %v239 = vshrl.u32 %v175, 16
      %v241 = vrot.slane %v239, 4
      %v242 = vor.u32 %v241, %v237
      %v243 = vrot.slane %v242, 4
      %v245 = vshll.u32 %v191, 16
      %v247 = vrot.slane %v245, 5
      %v248 = vsel %vm200, %v243, %v247
      %v250 = vshrl.u32 %v176, 16
      %v252 = vrot.slane %v250, 4
      %v253 = vshll.u32 %v176, 16
      %v255 = vrot.slane %v253, 5
      %v256 = vor.u32 %v252, %v255
      %v257 = vrot.slane %v256, 4
      %v259 = vshll.u32 %v177, 16
      %v261 = vrot.slane %v259, 5
      %v262 = vsel %vm200, %v257, %v261
      %v263 = vshrl.u32 %v177, 16
      %v265 = vrot.slane %v263, 4
      %v266 = vor.u32 %v265, %v261
      %v267 = vrot.slane %v266, 4
      %v269 = vshll.u32 %v192, 16
      %v271 = vrot.slane %v269, 5
      %v272 = vsel %vm200, %v267, %v271
      %v274 = vshrl.u32 %v178, 16
      %v276 = vrot.slane %v274, 4
      %v277 = vshll.u32 %v178, 16
      %v279 = vrot.slane %v277, 5
      %v280 = vor.u32 %v276, %v279
      %v281 = vrot.slane %v280, 4
      %v283 = vshll.u32 %v179, 16
      %v285 = vrot.slane %v283, 5
      %v286 = vsel %vm200, %v281, %v285
      %v287 = vshrl.u32 %v179, 16
      %v289 = vrot.slane %v287, 4
      %v290 = vor.u32 %v289, %v285
      %v291 = vrot.slane %v290, 4
      %v293 = vshll.u32 %v193, 16
      %v295 = vrot.slane %v293, 5
      %v296 = vsel %vm200, %v291, %v295
      %v298 = vshrl.u32 %v180, 16
      %v300 = vrot.slane %v298, 4
      %v301 = vshll.u32 %v180, 16
      %v303 = vrot.slane %v301, 5
      %v304 = vor.u32 %v300, %v303
      %v305 = vrot.slane %v304, 4
      %v307 = vshll.u32 %v181, 16
      %v309 = vrot.slane %v307, 5
      %v310 = vsel %vm200, %v305, %v309
      %v311 = vshrl.u32 %v181, 16
      %v313 = vrot.slane %v311, 4
      %v314 = vor.u32 %v313, %v309
      %v315 = vrot.slane %v314, 4
      %v317 = vshll.u32 %v194, 16
      %v319 = vrot.slane %v317, 5
      %v320 = vsel %vm200, %v315, %v319
      %v322 = vshrl.u32 %v182, 16
      %v324 = vrot.slane %v322, 4
      %v325 = vshll.u32 %v182, 16
      %v327 = vrot.slane %v325, 5
      %v328 = vor.u32 %v324, %v327
      %v329 = vrot.slane %v328, 4
      %v331 = vshll.u32 %v183, 16
      %v333 = vrot.slane %v331, 5
      %v334 = vsel %vm200, %v329, %v333
      %v335 = vshrl.u32 %v183, 16
      %v337 = vrot.slane %v335, 4
      %v338 = vor.u32 %v337, %v333
      %v339 = vrot.slane %v338, 4
      %v341 = vshll.u32 %v195, 16
      %v343 = vrot.slane %v341, 5
      %v344 = vsel %vm200, %v339, %v343
      %v346 = vshrl.u32 %v184, 16
      %v348 = vrot.slane %v346, 4
      %v349 = vshll.u32 %v184, 16
      %v351 = vrot.slane %v349, 5
      %v352 = vor.u32 %v348, %v351
      %v353 = vrot.slane %v352, 4
      %v355 = vshll.u32 %v185, 16
      %v357 = vrot.slane %v355, 5
      %v358 = vsel %vm200, %v353, %v357
      %v359 = vshrl.u32 %v185, 16
      %v361 = vrot.slane %v359, 4
      %v362 = vor.u32 %v361, %v357
      %v363 = vrot.slane %v362, 4
      %v365 = vshll.u32 %v196, 16
      %v367 = vrot.slane %v365, 5
      %v368 = vsel %vm200, %v363, %v367
      %v370 = vshrl.u32 %v186, 16
      %v372 = vrot.slane %v370, 4
      %v373 = vshll.u32 %v186, 16
      %v375 = vrot.slane %v373, 5
      %v376 = vor.u32 %v372, %v375
      %v377 = vrot.slane %v376, 4
      %v379 = vshll.u32 %v187, 16
      %v381 = vrot.slane %v379, 5
      %v382 = vsel %vm200, %v377, %v381
      %v383 = vshrl.u32 %v187, 16
      %v385 = vrot.slane %v383, 4
      %v386 = vor.u32 %v385, %v381
      %v387 = vrot.slane %v386, 4
      %v389 = vshll.u32 %v197, 16
      %v391 = vrot.slane %v389, 5
      %v392 = vsel %vm200, %v387, %v391
      %s393 = scalar_lea.vmem %s1, 8
      %v394 = vld [vmem:[%s393] sm:$0xf]
      %v395 = vld [vmem:[%s393 + $0x4] sm:$0xf]
      %v396 = vunpack.c.l.b16 %v214
      %v397 = vunpack.c.l.b16 %v224
      %v398 = vunpack.c.l.b16 %v238
      %v399 = vunpack.c.l.b16 %v248
      %v400 = vunpack.c.l.b16 %v262
      %v401 = vunpack.c.l.b16 %v272
      %v402 = vunpack.c.l.b16 %v286
      %v403 = vunpack.c.l.b16 %v296
      %v404 = vunpack.c.l.b16 %v310
      %v405 = vunpack.c.l.b16 %v320
      %v406 = vunpack.c.l.b16 %v334
      %v407 = vunpack.c.l.b16 %v344
      %v408 = vunpack.c.l.b16 %v358
      %v409 = vunpack.c.l.b16 %v368
      %v410 = vunpack.c.l.b16 %v382
      %v411 = vunpack.c.l.b16 %v392
      %v412 = vpack.c.b16 %v397, %v396
      %v413 = vpack.c.b16 %v399, %v398
      %v414 = vpack.c.b16 %v401, %v400
      %v415 = vpack.c.b16 %v403, %v402
      %v416 = vpack.c.b16 %v405, %v404
      %v417 = vpack.c.b16 %v407, %v406
      %v418 = vpack.c.b16 %v409, %v408
      %v419 = vpack.c.b16 %v411, %v410
      %v422 = vunpack.c.l.b16 %v394
      %v423 = vunpack.c.l.b16 %v395
      %v424 = vpack.c.b16 %v423, %v422
      %vm426 = vcmask 130048
      %v428 = vsel %vm426, %v412, 0
      %v431 = vsel %vm426, %v413, 0
      %v434 = vsel %vm426, %v414, 0
      %v437 = vsel %vm426, %v415, 0
      %v440 = vsel %vm426, %v416, 0
      %v443 = vsel %vm426, %v417, 0
      %v446 = vsel %vm426, %v418, 0
      %v449 = vsel %vm426, %v419, 0
      %451 = vmatprep.subr.bf16.mxu0 0
      %452 = vmatpush1.bf16.msra.mxu0 0
      %453 = vmatprep.subr.bf16.mxu0 0
      %454 = vmatpush1.bf16.msra.mxu0 0
      %455 = vmatprep.subr.bf16.mxu0 0
      %456 = vmatpush1.bf16.msra.mxu0 0
      %457 = vmatprep.subr.bf16.mxu0 0
      %458 = vmatpush1.bf16.msra.mxu0 0
      %459 = vmatprep.subr.bf16.mxu0 0
      %460 = vmatpush1.bf16.msra.mxu0 0
      %461 = vmatprep.subr.bf16.mxu0 0
      %462 = vmatpush1.bf16.msra.mxu0 0
      %463 = vmatprep.subr.bf16.mxu0 0
      %464 = vmatpush1.bf16.msra.mxu0 0
      %465 = vmatprep.subr.bf16.mxu0 0
      %466 = vmatpush1.bf16.msra.mxu0 %v424
      %467 = vmatprep.subr.bf16.mxu0 0
      %468 = vmatpush2.bf16.msra.mxu0 0
      %469 = vmatprep.subr.bf16.mxu0 0
      %470 = vmatpush2.bf16.msra.mxu0 0
      %471 = vmatprep.subr.bf16.mxu0 0
      %472 = vmatpush2.bf16.msra.mxu0 0
      %473 = vmatprep.subr.bf16.mxu0 0
      %474 = vmatpush2.bf16.msra.mxu0 0
      %475 = vmatprep.subr.bf16.mxu0 0
      %476 = vmatpush2.bf16.msra.mxu0 0
      %477 = vmatprep.subr.bf16.mxu0 0
      %478 = vmatpush2.bf16.msra.mxu0 0
      %479 = vmatprep.subr.bf16.mxu0 0
      %480 = vmatpush2.bf16.msra.mxu0 0
      %481 = vmatprep.subr.bf16.mxu0 0
      %482 = vmatpush2.bf16.msra.mxu0 0
      %483 = vmatprep.mubr.bf16.mxu0 0
      %484 = vmatmul.mubr.bf16.gmra.mxu0 %v428
      %v485 = vpop.f32.mrf.mxu0
      %v486 = vadd.f32 0.0, %v485
      %v487 = vpop.f32.mrf.mxu0
      %v488 = vpop.f32.mrf.mxu0
      %v489 = vadd.f32 0.0, %v488
      %v490 = vpop.f32.mrf.mxu0
      %491 = vmatprep.mubr.bf16.mxu0 0
      %492 = vmatmul.mubr.bf16.gmra.mxu0 %v431
      %v493 = vpop.f32.mrf.mxu0
      %v494 = vadd.f32 0.0, %v493
      %v495 = vpop.f32.mrf.mxu0
      %v496 = vpop.f32.mrf.mxu0
      %v497 = vadd.f32 0.0, %v496
      %v498 = vpop.f32.mrf.mxu0
      %499 = vmatprep.mubr.bf16.mxu0 0
      %500 = vmatmul.mubr.bf16.gmra.mxu0 %v434
      %v501 = vpop.f32.mrf.mxu0
      %v502 = vadd.f32 0.0, %v501
      %v503 = vpop.f32.mrf.mxu0
      %v504 = vpop.f32.mrf.mxu0
      %v505 = vadd.f32 0.0, %v504
      %v506 = vpop.f32.mrf.mxu0
      %507 = vmatprep.mubr.bf16.mxu0 0
      %508 = vmatmul.mubr.bf16.gmra.mxu0 %v437
      %v509 = vpop.f32.mrf.mxu0
      %v510 = vadd.f32 0.0, %v509
      %v511 = vpop.f32.mrf.mxu0
      %v512 = vpop.f32.mrf.mxu0
      %v513 = vadd.f32 0.0, %v512
      %v514 = vpop.f32.mrf.mxu0
      %515 = vmatprep.mubr.bf16.mxu0 0
      %516 = vmatmul.mubr.bf16.gmra.mxu0 %v440
      %v517 = vpop.f32.mrf.mxu0
      %v518 = vadd.f32 0.0, %v517
      %v519 = vpop.f32.mrf.mxu0
      %v520 = vpop.f32.mrf.mxu0
      %v521 = vadd.f32 0.0, %v520
      %v522 = vpop.f32.mrf.mxu0
      %523 = vmatprep.mubr.bf16.mxu0 0
      %524 = vmatmul.mubr.bf16.gmra.mxu0 %v443
      %v525 = vpop.f32.mrf.mxu0
      %v526 = vadd.f32 0.0, %v525
      %v527 = vpop.f32.mrf.mxu0
      %v528 = vpop.f32.mrf.mxu0
      %v529 = vadd.f32 0.0, %v528
      %v530 = vpop.f32.mrf.mxu0
      %531 = vmatprep.mubr.bf16.mxu0 0
      %532 = vmatmul.mubr.bf16.gmra.mxu0 %v446
      %v533 = vpop.f32.mrf.mxu0
      %v534 = vadd.f32 0.0, %v533
      %v535 = vpop.f32.mrf.mxu0
      %v536 = vpop.f32.mrf.mxu0
      %v537 = vadd.f32 0.0, %v536
      %v538 = vpop.f32.mrf.mxu0
      %539 = vmatprep.mubr.bf16.mxu0 0
      %540 = vmatmul.mubr.bf16.gmra.mxu0 %v449
      %v541 = vpop.f32.mrf.mxu0
      %v542 = vadd.f32 0.0, %v541
      %v543 = vpop.f32.mrf.mxu0
      %v544 = vpop.f32.mrf.mxu0
      %v545 = vadd.f32 0.0, %v544
      %v546 = vpop.f32.mrf.mxu0
      %547 = vdwg.mxu0
      %v564 = vunpack.c.l.b16 %v172
      %v565 = vunpack.c.l.b16 %v173
      %v566 = vunpack.c.l.b16 %v174
      %v567 = vunpack.c.l.b16 %v175
      %v568 = vunpack.c.l.b16 %v176
      %v569 = vunpack.c.l.b16 %v177
      %v570 = vunpack.c.l.b16 %v178
      %v571 = vunpack.c.l.b16 %v179
      %v572 = vunpack.c.l.b16 %v180
      %v573 = vunpack.c.l.b16 %v181
      %v574 = vunpack.c.l.b16 %v182
      %v575 = vunpack.c.l.b16 %v183
      %v576 = vunpack.c.l.b16 %v184
      %v577 = vunpack.c.l.b16 %v185
      %v578 = vunpack.c.l.b16 %v186
      %v579 = vunpack.c.l.b16 %v187
      %v580 = vpack.c.b16 %v565, %v564
      %v581 = vpack.c.b16 %v567, %v566
      %v582 = vpack.c.b16 %v569, %v568
      %v583 = vpack.c.b16 %v571, %v570
      %v584 = vpack.c.b16 %v573, %v572
      %v585 = vpack.c.b16 %v575, %v574
      %v586 = vpack.c.b16 %v577, %v576
      %v587 = vpack.c.b16 %v579, %v578
      %v590 = vunpack.c.l.b16 %v188
      %v591 = vunpack.c.l.b16 %v189
      %v592 = vpack.c.b16 %v591, %v590
      %v595 = vsel %vm426, %v580, 0
      %v598 = vsel %vm426, %v581, 0
      %v601 = vsel %vm426, %v582, 0
      %v604 = vsel %vm426, %v583, 0
      %v607 = vsel %vm426, %v584, 0
      %v610 = vsel %vm426, %v585, 0
      %v613 = vsel %vm426, %v586, 0
      %v616 = vsel %vm426, %v587, 0
      %618 = vmatprep.subr.bf16.mxu0 0
      %619 = vmatpush1.bf16.msra.mxu0 0
      %620 = vmatprep.subr.bf16.mxu0 0
      %621 = vmatpush1.bf16.msra.mxu0 0
      %622 = vmatprep.subr.bf16.mxu0 0
      %623 = vmatpush1.bf16.msra.mxu0 0
      %624 = vmatprep.subr.bf16.mxu0 0
      %625 = vmatpush1.bf16.msra.mxu0 0
      %626 = vmatprep.subr.bf16.mxu0 0
      %627 = vmatpush1.bf16.msra.mxu0 0
      %628 = vmatprep.subr.bf16.mxu0 0
      %629 = vmatpush1.bf16.msra.mxu0 0
      %630 = vmatprep.subr.bf16.mxu0 0
      %631 = vmatpush1.bf16.msra.mxu0 0
      %632 = vmatprep.subr.bf16.mxu0 0
      %633 = vmatpush1.bf16.msra.mxu0 %v592
      %634 = vmatprep.subr.bf16.mxu0 0
      %635 = vmatpush2.bf16.msra.mxu0 0
      %636 = vmatprep.subr.bf16.mxu0 0
      %637 = vmatpush2.bf16.msra.mxu0 0
      %638 = vmatprep.subr.bf16.mxu0 0
      %639 = vmatpush2.bf16.msra.mxu0 0
      %640 = vmatprep.subr.bf16.mxu0 0
      %641 = vmatpush2.bf16.msra.mxu0 0
      %642 = vmatprep.subr.bf16.mxu0 0
      %643 = vmatpush2.bf16.msra.mxu0 0
      %644 = vmatprep.subr.bf16.mxu0 0
      %645 = vmatpush2.bf16.msra.mxu0 0
      %646 = vmatprep.subr.bf16.mxu0 0
      %647 = vmatpush2.bf16.msra.mxu0 0
      %648 = vmatprep.subr.bf16.mxu0 0
      %649 = vmatpush2.bf16.msra.mxu0 0
      %650 = vmatprep.mubr.bf16.mxu0 0
      %651 = vmatmul.mubr.bf16.gmra.mxu0 %v595
      %v652 = vpop.f32.mrf.mxu0
      %v653 = vadd.f32 %v486, %v652
      %v654 = vpop.f32.mrf.mxu0
      %v655 = vpop.f32.mrf.mxu0
      %v656 = vadd.f32 %v489, %v655
      %v657 = vpop.f32.mrf.mxu0
      %658 = vmatprep.mubr.bf16.mxu0 0
      %659 = vmatmul.mubr.bf16.gmra.mxu0 %v598
      %v660 = vpop.f32.mrf.mxu0
      %v661 = vadd.f32 %v494, %v660
      %v662 = vpop.f32.mrf.mxu0
      %v663 = vpop.f32.mrf.mxu0
      %v664 = vadd.f32 %v497, %v663
      %v665 = vpop.f32.mrf.mxu0
      %666 = vmatprep.mubr.bf16.mxu0 0
      %667 = vmatmul.mubr.bf16.gmra.mxu0 %v601
      %v668 = vpop.f32.mrf.mxu0
      %v669 = vadd.f32 %v502, %v668
      %v670 = vpop.f32.mrf.mxu0
      %v671 = vpop.f32.mrf.mxu0
      %v672 = vadd.f32 %v505, %v671
      %v673 = vpop.f32.mrf.mxu0
      %674 = vmatprep.mubr.bf16.mxu0 0
      %675 = vmatmul.mubr.bf16.gmra.mxu0 %v604
      %v676 = vpop.f32.mrf.mxu0
      %v677 = vadd.f32 %v510, %v676
      %v678 = vpop.f32.mrf.mxu0
      %v679 = vpop.f32.mrf.mxu0
      %v680 = vadd.f32 %v513, %v679
      %v681 = vpop.f32.mrf.mxu0
      %682 = vmatprep.mubr.bf16.mxu0 0
      %683 = vmatmul.mubr.bf16.gmra.mxu0 %v607
      %v684 = vpop.f32.mrf.mxu0
      %v685 = vadd.f32 %v518, %v684
      %v686 = vpop.f32.mrf.mxu0
      %v687 = vpop.f32.mrf.mxu0
      %v688 = vadd.f32 %v521, %v687
      %v689 = vpop.f32.mrf.mxu0
      %690 = vmatprep.mubr.bf16.mxu0 0
      %691 = vmatmul.mubr.bf16.gmra.mxu0 %v610
      %v692 = vpop.f32.mrf.mxu0
      %v693 = vadd.f32 %v526, %v692
      %v694 = vpop.f32.mrf.mxu0
      %v695 = vpop.f32.mrf.mxu0
      %v696 = vadd.f32 %v529, %v695
      %v697 = vpop.f32.mrf.mxu0
      %698 = vmatprep.mubr.bf16.mxu0 0
      %699 = vmatmul.mubr.bf16.gmra.mxu0 %v613
      %v700 = vpop.f32.mrf.mxu0
      %v701 = vadd.f32 %v534, %v700
      %v702 = vpop.f32.mrf.mxu0
      %v703 = vpop.f32.mrf.mxu0
      %v704 = vadd.f32 %v537, %v703
      %v705 = vpop.f32.mrf.mxu0
      %706 = vmatprep.mubr.bf16.mxu0 0
      %707 = vmatmul.mubr.bf16.gmra.mxu0 %v616
      %v708 = vpop.f32.mrf.mxu0
      %v709 = vadd.f32 %v542, %v708
      %v710 = vpop.f32.mrf.mxu0
      %v711 = vpop.f32.mrf.mxu0
      %v712 = vadd.f32 %v545, %v711
      %v713 = vpop.f32.mrf.mxu0
      %714 = vdwg.mxu0
      %v715 = vld [vmem:[%s165] sm:$0xe]
      %v716 = vld [vmem:[%s165 + $0xc] sm:$0xe]
      %v717 = vld [vmem:[%s165 + $0x18] sm:$0xe]
      %v718 = vld [vmem:[%s165 + $0x24] sm:$0xe]
      %v719 = vld [vmem:[%s165 + $0x30] sm:$0xe]
      %v720 = vld [vmem:[%s165 + $0x3c] sm:$0xe]
      %v721 = vld [vmem:[%s165 + $0x48] sm:$0xe]
      %v722 = vld [vmem:[%s165 + $0x54] sm:$0xe]
      %vm739 = vcmask 1042432
      %vm740 = vcmask 1046532
      %vm741 = vmor %vm739, %vm740
      %v742 = vrot.slane %v715, 5
      %v743 = vrot.slane %v742, 4
      %v744 = vrot.slane %v173, 5
      %v745 = vsel %vm741, %v743, %v744
      %v746 = vrot.slane %v744, 4
      %v747 = vrot.slane %v190, 5
      %v748 = vsel %vm741, %v746, %v747
      %v749 = vrot.slane %v716, 5
      %v750 = vrot.slane %v749, 4
      %v751 = vrot.slane %v175, 5
      %v752 = vsel %vm741, %v750, %v751
      %v753 = vrot.slane %v751, 4
      %v754 = vrot.slane %v191, 5
      %v755 = vsel %vm741, %v753, %v754
      %v756 = vrot.slane %v717, 5
      %v757 = vrot.slane %v756, 4
      %v758 = vrot.slane %v177, 5
      %v759 = vsel %vm741, %v757, %v758
      %v760 = vrot.slane %v758, 4
      %v761 = vrot.slane %v192, 5
      %v762 = vsel %vm741, %v760, %v761
      %v763 = vrot.slane %v718, 5
      %v764 = vrot.slane %v763, 4
      %v765 = vrot.slane %v179, 5
      %v766 = vsel %vm741, %v764, %v765
      %v767 = vrot.slane %v765, 4
      %v768 = vrot.slane %v193, 5
      %v769 = vsel %vm741, %v767, %v768
      %v770 = vrot.slane %v719, 5
      %v771 = vrot.slane %v770, 4
      %v772 = vrot.slane %v181, 5
      %v773 = vsel %vm741, %v771, %v772
      %v774 = vrot.slane %v772, 4
      %v775 = vrot.slane %v194, 5
      %v776 = vsel %vm741, %v774, %v775
      %v777 = vrot.slane %v720, 5
      %v778 = vrot.slane %v777, 4
      %v779 = vrot.slane %v183, 5
      %v780 = vsel %vm741, %v778, %v779
      %v781 = vrot.slane %v779, 4
      %v782 = vrot.slane %v195, 5
      %v783 = vsel %vm741, %v781, %v782
      %v784 = vrot.slane %v721, 5
      %v785 = vrot.slane %v784, 4
      %v786 = vrot.slane %v185, 5
      %v787 = vsel %vm741, %v785, %v786
      %v788 = vrot.slane %v786, 4
      %v789 = vrot.slane %v196, 5
      %v790 = vsel %vm741, %v788, %v789
      %v791 = vrot.slane %v722, 5
      %v792 = vrot.slane %v791, 4
      %v793 = vrot.slane %v187, 5
      %v794 = vsel %vm741, %v792, %v793
      %v795 = vrot.slane %v793, 4
      %v796 = vrot.slane %v197, 5
      %v797 = vsel %vm741, %v795, %v796
      %s798 = scalar_lea.vmem %s1, 16
      %v799 = vld [vmem:[%s798] sm:$0xf]
      %v800 = vld [vmem:[%s798 + $0x4] sm:$0xf]
      %v801 = vunpack.c.l.b16 %v745
      %v802 = vunpack.c.l.b16 %v748
      %v803 = vunpack.c.l.b16 %v752
      %v804 = vunpack.c.l.b16 %v755
      %v805 = vunpack.c.l.b16 %v759
      %v806 = vunpack.c.l.b16 %v762
      %v807 = vunpack.c.l.b16 %v766
      %v808 = vunpack.c.l.b16 %v769
      %v809 = vunpack.c.l.b16 %v773
      %v810 = vunpack.c.l.b16 %v776
      %v811 = vunpack.c.l.b16 %v780
      %v812 = vunpack.c.l.b16 %v783
      %v813 = vunpack.c.l.b16 %v787
      %v814 = vunpack.c.l.b16 %v790
      %v815 = vunpack.c.l.b16 %v794
      %v816 = vunpack.c.l.b16 %v797
      %v817 = vpack.c.b16 %v802, %v801
      %v818 = vpack.c.b16 %v804, %v803
      %v819 = vpack.c.b16 %v806, %v805
      %v820 = vpack.c.b16 %v808, %v807
      %v821 = vpack.c.b16 %v810, %v809
      %v822 = vpack.c.b16 %v812, %v811
      %v823 = vpack.c.b16 %v814, %v813
      %v824 = vpack.c.b16 %v816, %v815
      %v827 = vunpack.c.l.b16 %v799
      %v828 = vunpack.c.l.b16 %v800
      %v829 = vpack.c.b16 %v828, %v827
      %v832 = vsel %vm426, %v817, 0
      %v835 = vsel %vm426, %v818, 0
      %v838 = vsel %vm426, %v819, 0
      %v841 = vsel %vm426, %v820, 0
      %v844 = vsel %vm426, %v821, 0
      %v847 = vsel %vm426, %v822, 0
      %v850 = vsel %vm426, %v823, 0
      %v853 = vsel %vm426, %v824, 0
      %855 = vmatprep.subr.bf16.mxu0 0
      %856 = vmatpush1.bf16.msra.mxu0 0
      %857 = vmatprep.subr.bf16.mxu0 0
      %858 = vmatpush1.bf16.msra.mxu0 0
      %859 = vmatprep.subr.bf16.mxu0 0
      %860 = vmatpush1.bf16.msra.mxu0 0
      %861 = vmatprep.subr.bf16.mxu0 0
      %862 = vmatpush1.bf16.msra.mxu0 0
      %863 = vmatprep.subr.bf16.mxu0 0
      %864 = vmatpush1.bf16.msra.mxu0 0
      %865 = vmatprep.subr.bf16.mxu0 0
      %866 = vmatpush1.bf16.msra.mxu0 0
      %867 = vmatprep.subr.bf16.mxu0 0
      %868 = vmatpush1.bf16.msra.mxu0 0
      %869 = vmatprep.subr.bf16.mxu0 0
      %870 = vmatpush1.bf16.msra.mxu0 %v829
      %871 = vmatprep.subr.bf16.mxu0 0
      %872 = vmatpush2.bf16.msra.mxu0 0
      %873 = vmatprep.subr.bf16.mxu0 0
      %874 = vmatpush2.bf16.msra.mxu0 0
      %875 = vmatprep.subr.bf16.mxu0 0
      %876 = vmatpush2.bf16.msra.mxu0 0
      %877 = vmatprep.subr.bf16.mxu0 0
      %878 = vmatpush2.bf16.msra.mxu0 0
      %879 = vmatprep.subr.bf16.mxu0 0
      %880 = vmatpush2.bf16.msra.mxu0 0
      %881 = vmatprep.subr.bf16.mxu0 0
      %882 = vmatpush2.bf16.msra.mxu0 0
      %883 = vmatprep.subr.bf16.mxu0 0
      %884 = vmatpush2.bf16.msra.mxu0 0
      %885 = vmatprep.subr.bf16.mxu0 0
      %886 = vmatpush2.bf16.msra.mxu0 0
      %887 = vmatprep.mubr.bf16.mxu0 0
      %888 = vmatmul.mubr.bf16.gmra.mxu0 %v832
      %v889 = vpop.f32.mrf.mxu0
      %v890 = vadd.f32 0.0, %v889
      %v891 = vpop.f32.mrf.mxu0
      %v892 = vpop.f32.mrf.mxu0
      %v893 = vadd.f32 0.0, %v892
      %v894 = vpop.f32.mrf.mxu0
      %895 = vmatprep.mubr.bf16.mxu0 0
      %896 = vmatmul.mubr.bf16.gmra.mxu0 %v835
      %v897 = vpop.f32.mrf.mxu0
      %v898 = vadd.f32 0.0, %v897
      %v899 = vpop.f32.mrf.mxu0
      %v900 = vpop.f32.mrf.mxu0
      %v901 = vadd.f32 0.0, %v900
      %v902 = vpop.f32.mrf.mxu0
      %903 = vmatprep.mubr.bf16.mxu0 0
      %904 = vmatmul.mubr.bf16.gmra.mxu0 %v838
      %v905 = vpop.f32.mrf.mxu0
      %v906 = vadd.f32 0.0, %v905
      %v907 = vpop.f32.mrf.mxu0
      %v908 = vpop.f32.mrf.mxu0
      %v909 = vadd.f32 0.0, %v908
      %v910 = vpop.f32.mrf.mxu0
      %911 = vmatprep.mubr.bf16.mxu0 0
      %912 = vmatmul.mubr.bf16.gmra.mxu0 %v841
      %v913 = vpop.f32.mrf.mxu0
      %v914 = vadd.f32 0.0, %v913
      %v915 = vpop.f32.mrf.mxu0
      %v916 = vpop.f32.mrf.mxu0
      %v917 = vadd.f32 0.0, %v916
      %v918 = vpop.f32.mrf.mxu0
      %919 = vmatprep.mubr.bf16.mxu0 0
      %920 = vmatmul.mubr.bf16.gmra.mxu0 %v844
      %v921 = vpop.f32.mrf.mxu0
      %v922 = vadd.f32 0.0, %v921
      %v923 = vpop.f32.mrf.mxu0
      %v924 = vpop.f32.mrf.mxu0
      %v925 = vadd.f32 0.0, %v924
      %v926 = vpop.f32.mrf.mxu0
      %927 = vmatprep.mubr.bf16.mxu0 0
      %928 = vmatmul.mubr.bf16.gmra.mxu0 %v847
      %v929 = vpop.f32.mrf.mxu0
      %v930 = vadd.f32 0.0, %v929
      %v931 = vpop.f32.mrf.mxu0
      %v932 = vpop.f32.mrf.mxu0
      %v933 = vadd.f32 0.0, %v932
      %v934 = vpop.f32.mrf.mxu0
      %935 = vmatprep.mubr.bf16.mxu0 0
      %936 = vmatmul.mubr.bf16.gmra.mxu0 %v850
      %v937 = vpop.f32.mrf.mxu0
      %v938 = vadd.f32 0.0, %v937
      %v939 = vpop.f32.mrf.mxu0
      %v940 = vpop.f32.mrf.mxu0
      %v941 = vadd.f32 0.0, %v940
      %v942 = vpop.f32.mrf.mxu0
      %943 = vmatprep.mubr.bf16.mxu0 0
      %944 = vmatmul.mubr.bf16.gmra.mxu0 %v853
      %v945 = vpop.f32.mrf.mxu0
      %v946 = vadd.f32 0.0, %v945
      %v947 = vpop.f32.mrf.mxu0
      %v948 = vpop.f32.mrf.mxu0
      %v949 = vadd.f32 0.0, %v948
      %v950 = vpop.f32.mrf.mxu0
      %951 = vdwg.mxu0
      %v952 = vadd.f32 %v653, %v890
      %v953 = vadd.f32 %v656, %v893
      %v954 = vadd.f32 %v661, %v898
      %v955 = vadd.f32 %v664, %v901
      %v956 = vadd.f32 %v669, %v906
      %v957 = vadd.f32 %v672, %v909
      %v958 = vadd.f32 %v677, %v914
      %v959 = vadd.f32 %v680, %v917
      %v960 = vadd.f32 %v685, %v922
      %v961 = vadd.f32 %v688, %v925
      %v962 = vadd.f32 %v693, %v930
      %v963 = vadd.f32 %v696, %v933
      %v964 = vadd.f32 %v701, %v938
      %v965 = vadd.f32 %v704, %v941
      %v966 = vadd.f32 %v709, %v946
      %v967 = vadd.f32 %v712, %v949
      %s968 = scalar_lea.vmem %s165, 12
      %v969 = vld [vmem:[%s968] sm:$0xf]
      %v970 = vld [vmem:[%s968 + $0x4] sm:$0xf]
      %v971 = vld [vmem:[%s968 + $0xc] sm:$0xf]
      %v972 = vld [vmem:[%s968 + $0x10] sm:$0xf]
      %v973 = vld [vmem:[%s968 + $0x18] sm:$0xf]
      %v974 = vld [vmem:[%s968 + $0x1c] sm:$0xf]
      %v975 = vld [vmem:[%s968 + $0x24] sm:$0xf]
      %v976 = vld [vmem:[%s968 + $0x28] sm:$0xf]
      %v977 = vld [vmem:[%s968 + $0x30] sm:$0xf]
      %v978 = vld [vmem:[%s968 + $0x34] sm:$0xf]
      %v979 = vld [vmem:[%s968 + $0x3c] sm:$0xf]
      %v980 = vld [vmem:[%s968 + $0x40] sm:$0xf]
      %v981 = vld [vmem:[%s968 + $0x48] sm:$0xf]
      %v982 = vld [vmem:[%s968 + $0x4c] sm:$0xf]
      %v983 = vld [vmem:[%s968 + $0x54] sm:$0xf]
      %v984 = vld [vmem:[%s968 + $0x58] sm:$0xf]
      %s985 = scalar_lea.vmem %s1, 24
      %v986 = vld [vmem:[%s985] sm:$0xf]
      %v987 = vld [vmem:[%s985 + $0x4] sm:$0xf]
      %v1004 = vunpack.c.l.b16 %v969
      %v1005 = vunpack.c.l.b16 %v970
      %v1006 = vunpack.c.l.b16 %v971
      %v1007 = vunpack.c.l.b16 %v972
      %v1008 = vunpack.c.l.b16 %v973
      %v1009 = vunpack.c.l.b16 %v974
      %v1010 = vunpack.c.l.b16 %v975
      %v1011 = vunpack.c.l.b16 %v976
      %v1012 = vunpack.c.l.b16 %v977
      %v1013 = vunpack.c.l.b16 %v978
      %v1014 = vunpack.c.l.b16 %v979
      %v1015 = vunpack.c.l.b16 %v980
      %v1016 = vunpack.c.l.b16 %v981
      %v1017 = vunpack.c.l.b16 %v982
      %v1018 = vunpack.c.l.b16 %v983
      %v1019 = vunpack.c.l.b16 %v984
      %v1020 = vpack.c.b16 %v1005, %v1004
      %v1021 = vpack.c.b16 %v1007, %v1006
      %v1022 = vpack.c.b16 %v1009, %v1008
      %v1023 = vpack.c.b16 %v1011, %v1010
      %v1024 = vpack.c.b16 %v1013, %v1012
      %v1025 = vpack.c.b16 %v1015, %v1014
      %v1026 = vpack.c.b16 %v1017, %v1016
      %v1027 = vpack.c.b16 %v1019, %v1018
      %v1030 = vunpack.c.l.b16 %v986
      %v1031 = vunpack.c.l.b16 %v987
      %v1032 = vpack.c.b16 %v1031, %v1030
      %v1035 = vsel %vm426, %v1020, 0
      %v1038 = vsel %vm426, %v1021, 0
      %v1041 = vsel %vm426, %v1022, 0
      %v1044 = vsel %vm426, %v1023, 0
      %v1047 = vsel %vm426, %v1024, 0
      %v1050 = vsel %vm426, %v1025, 0
      %v1053 = vsel %vm426, %v1026, 0
      %v1056 = vsel %vm426, %v1027, 0
      %1058 = vmatprep.subr.bf16.mxu0 0
      %1059 = vmatpush1.bf16.msra.mxu0 0
      %1060 = vmatprep.subr.bf16.mxu0 0
      %1061 = vmatpush1.bf16.msra.mxu0 0
      %1062 = vmatprep.subr.bf16.mxu0 0
      %1063 = vmatpush1.bf16.msra.mxu0 0
      %1064 = vmatprep.subr.bf16.mxu0 0
      %1065 = vmatpush1.bf16.msra.mxu0 0
      %1066 = vmatprep.subr.bf16.mxu0 0
      %1067 = vmatpush1.bf16.msra.mxu0 0
      %1068 = vmatprep.subr.bf16.mxu0 0
      %1069 = vmatpush1.bf16.msra.mxu0 0
      %1070 = vmatprep.subr.bf16.mxu0 0
      %1071 = vmatpush1.bf16.msra.mxu0 0
      %1072 = vmatprep.subr.bf16.mxu0 0
      %1073 = vmatpush1.bf16.msra.mxu0 %v1032
      %1074 = vmatprep.subr.bf16.mxu0 0
      %1075 = vmatpush2.bf16.msra.mxu0 0
      %1076 = vmatprep.subr.bf16.mxu0 0
      %1077 = vmatpush2.bf16.msra.mxu0 0
      %1078 = vmatprep.subr.bf16.mxu0 0
      %1079 = vmatpush2.bf16.msra.mxu0 0
      %1080 = vmatprep.subr.bf16.mxu0 0
      %1081 = vmatpush2.bf16.msra.mxu0 0
      %1082 = vmatprep.subr.bf16.mxu0 0
      %1083 = vmatpush2.bf16.msra.mxu0 0
      %1084 = vmatprep.subr.bf16.mxu0 0
      %1085 = vmatpush2.bf16.msra.mxu0 0
      %1086 = vmatprep.subr.bf16.mxu0 0
      %1087 = vmatpush2.bf16.msra.mxu0 0
      %1088 = vmatprep.subr.bf16.mxu0 0
      %1089 = vmatpush2.bf16.msra.mxu0 0
      %1090 = vmatprep.mubr.bf16.mxu0 0
      %1091 = vmatmul.mubr.bf16.gmra.mxu0 %v1035
      %v1092 = vpop.f32.mrf.mxu0
      %v1093 = vadd.f32 0.0, %v1092
      %v1094 = vpop.f32.mrf.mxu0
      %v1095 = vpop.f32.mrf.mxu0
      %v1096 = vadd.f32 0.0, %v1095
      %v1097 = vpop.f32.mrf.mxu0
      %1098 = vmatprep.mubr.bf16.mxu0 0
      %1099 = vmatmul.mubr.bf16.gmra.mxu0 %v1038
      %v1100 = vpop.f32.mrf.mxu0
      %v1101 = vadd.f32 0.0, %v1100
      %v1102 = vpop.f32.mrf.mxu0
      %v1103 = vpop.f32.mrf.mxu0
      %v1104 = vadd.f32 0.0, %v1103
      %v1105 = vpop.f32.mrf.mxu0
      %1106 = vmatprep.mubr.bf16.mxu0 0
      %1107 = vmatmul.mubr.bf16.gmra.mxu0 %v1041
      %v1108 = vpop.f32.mrf.mxu0
      %v1109 = vadd.f32 0.0, %v1108
      %v1110 = vpop.f32.mrf.mxu0
      %v1111 = vpop.f32.mrf.mxu0
      %v1112 = vadd.f32 0.0, %v1111
      %v1113 = vpop.f32.mrf.mxu0
      %1114 = vmatprep.mubr.bf16.mxu0 0
      %1115 = vmatmul.mubr.bf16.gmra.mxu0 %v1044
      %v1116 = vpop.f32.mrf.mxu0
      %v1117 = vadd.f32 0.0, %v1116
      %v1118 = vpop.f32.mrf.mxu0
      %v1119 = vpop.f32.mrf.mxu0
      %v1120 = vadd.f32 0.0, %v1119
      %v1121 = vpop.f32.mrf.mxu0
      %1122 = vmatprep.mubr.bf16.mxu0 0
      %1123 = vmatmul.mubr.bf16.gmra.mxu0 %v1047
      %v1124 = vpop.f32.mrf.mxu0
      %v1125 = vadd.f32 0.0, %v1124
      %v1126 = vpop.f32.mrf.mxu0
      %v1127 = vpop.f32.mrf.mxu0
      %v1128 = vadd.f32 0.0, %v1127
      %v1129 = vpop.f32.mrf.mxu0
      %1130 = vmatprep.mubr.bf16.mxu0 0
      %1131 = vmatmul.mubr.bf16.gmra.mxu0 %v1050
      %v1132 = vpop.f32.mrf.mxu0
      %v1133 = vadd.f32 0.0, %v1132
      %v1134 = vpop.f32.mrf.mxu0
      %v1135 = vpop.f32.mrf.mxu0
      %v1136 = vadd.f32 0.0, %v1135
      %v1137 = vpop.f32.mrf.mxu0
      %1138 = vmatprep.mubr.bf16.mxu0 0
      %1139 = vmatmul.mubr.bf16.gmra.mxu0 %v1053
      %v1140 = vpop.f32.mrf.mxu0
      %v1141 = vadd.f32 0.0, %v1140
      %v1142 = vpop.f32.mrf.mxu0
      %v1143 = vpop.f32.mrf.mxu0
      %v1144 = vadd.f32 0.0, %v1143
      %v1145 = vpop.f32.mrf.mxu0
      %1146 = vmatprep.mubr.bf16.mxu0 0
      %1147 = vmatmul.mubr.bf16.gmra.mxu0 %v1056
      %v1148 = vpop.f32.mrf.mxu0
      %v1149 = vadd.f32 0.0, %v1148
      %v1150 = vpop.f32.mrf.mxu0
      %v1151 = vpop.f32.mrf.mxu0
      %v1152 = vadd.f32 0.0, %v1151
      %v1153 = vpop.f32.mrf.mxu0
      %1154 = vdwg.mxu0
      %v1155 = vadd.f32 %v952, %v1093
      %v1156 = vadd.f32 %v953, %v1096
      %v1157 = vadd.f32 %v954, %v1101
      %v1158 = vadd.f32 %v955, %v1104
      %v1159 = vadd.f32 %v956, %v1109
      %v1160 = vadd.f32 %v957, %v1112
      %v1161 = vadd.f32 %v958, %v1117
      %v1162 = vadd.f32 %v959, %v1120
      %v1163 = vadd.f32 %v960, %v1125
      %v1164 = vadd.f32 %v961, %v1128
      %v1165 = vadd.f32 %v962, %v1133
      %v1166 = vadd.f32 %v963, %v1136
      %v1167 = vadd.f32 %v964, %v1141
      %v1168 = vadd.f32 %v965, %v1144
      %v1169 = vadd.f32 %v966, %v1149
      %v1170 = vadd.f32 %v967, %v1152
      %v1171 = vld [vmem:[%s968] sm:$0xf]
      %v1172 = vld [vmem:[%s968 + $0x4] sm:$0xf]
      %v1173 = vld [vmem:[%s968 + $0x8] sm:$0x1]
      %v1174 = vld [vmem:[%s968 + $0xc] sm:$0xf]
      %v1175 = vld [vmem:[%s968 + $0x10] sm:$0xf]
      %v1176 = vld [vmem:[%s968 + $0x14] sm:$0x1]
      %v1177 = vld [vmem:[%s968 + $0x18] sm:$0xf]
      %v1178 = vld [vmem:[%s968 + $0x1c] sm:$0xf]
      %v1179 = vld [vmem:[%s968 + $0x20] sm:$0x1]
      %v1180 = vld [vmem:[%s968 + $0x24] sm:$0xf]
      %v1181 = vld [vmem:[%s968 + $0x28] sm:$0xf]
      %v1182 = vld [vmem:[%s968 + $0x2c] sm:$0x1]
      %v1183 = vld [vmem:[%s968 + $0x30] sm:$0xf]
      %v1184 = vld [vmem:[%s968 + $0x34] sm:$0xf]
      %v1185 = vld [vmem:[%s968 + $0x38] sm:$0x1]
      %v1186 = vld [vmem:[%s968 + $0x3c] sm:$0xf]
      %v1187 = vld [vmem:[%s968 + $0x40] sm:$0xf]
      %v1188 = vld [vmem:[%s968 + $0x44] sm:$0x1]
      %v1189 = vld [vmem:[%s968 + $0x48] sm:$0xf]
      %v1190 = vld [vmem:[%s968 + $0x4c] sm:$0xf]
      %v1191 = vld [vmem:[%s968 + $0x50] sm:$0x1]
      %v1192 = vld [vmem:[%s968 + $0x54] sm:$0xf]
      %v1193 = vld [vmem:[%s968 + $0x58] sm:$0xf]
      %v1194 = vld [vmem:[%s968 + $0x5c] sm:$0x1]
      %v1196 = vshrl.u32 %v1171, 16
      %v1198 = vrot.slane %v1196, 4
      %v1199 = vshll.u32 %v1171, 16
      %v1201 = vrot.slane %v1199, 5
      %v1202 = vor.u32 %v1198, %v1201
      %v1203 = vrot.slane %v1202, 4
      %v1205 = vshll.u32 %v1172, 16
      %v1207 = vrot.slane %v1205, 5
      %v1208 = vsel %vm200, %v1203, %v1207
      %v1209 = vshrl.u32 %v1172, 16
      %v1211 = vrot.slane %v1209, 4
      %v1212 = vor.u32 %v1211, %v1207
      %v1213 = vrot.slane %v1212, 4
      %v1215 = vshll.u32 %v1173, 16
      %v1217 = vrot.slane %v1215, 5
      %v1218 = vsel %vm200, %v1213, %v1217
      %v1220 = vshrl.u32 %v1174, 16
      %v1222 = vrot.slane %v1220, 4
      %v1223 = vshll.u32 %v1174, 16
      %v1225 = vrot.slane %v1223, 5
      %v1226 = vor.u32 %v1222, %v1225
      %v1227 = vrot.slane %v1226, 4
      %v1229 = vshll.u32 %v1175, 16
      %v1231 = vrot.slane %v1229, 5
      %v1232 = vsel %vm200, %v1227, %v1231
      %v1233 = vshrl.u32 %v1175, 16
      %v1235 = vrot.slane %v1233, 4
      %v1236 = vor.u32 %v1235, %v1231
      %v1237 = vrot.slane %v1236, 4
      %v1239 = vshll.u32 %v1176, 16
      %v1241 = vrot.slane %v1239, 5
      %v1242 = vsel %vm200, %v1237, %v1241
      %v1244 = vshrl.u32 %v1177, 16
      %v1246 = vrot.slane %v1244, 4
      %v1247 = vshll.u32 %v1177, 16
      %v1249 = vrot.slane %v1247, 5
      %v1250 = vor.u32 %v1246, %v1249
      %v1251 = vrot.slane %v1250, 4
      %v1253 = vshll.u32 %v1178, 16
      %v1255 = vrot.slane %v1253, 5
      %v1256 = vsel %vm200, %v1251, %v1255
      %v1257 = vshrl.u32 %v1178, 16
      %v1259 = vrot.slane %v1257, 4
      %v1260 = vor.u32 %v1259, %v1255
      %v1261 = vrot.slane %v1260, 4
      %v1263 = vshll.u32 %v1179, 16
      %v1265 = vrot.slane %v1263, 5
      %v1266 = vsel %vm200, %v1261, %v1265
      %v1268 = vshrl.u32 %v1180, 16
      %v1270 = vrot.slane %v1268, 4
      %v1271 = vshll.u32 %v1180, 16
      %v1273 = vrot.slane %v1271, 5
      %v1274 = vor.u32 %v1270, %v1273
      %v1275 = vrot.slane %v1274, 4
      %v1277 = vshll.u32 %v1181, 16
      %v1279 = vrot.slane %v1277, 5
      %v1280 = vsel %vm200, %v1275, %v1279
      %v1281 = vshrl.u32 %v1181, 16
      %v1283 = vrot.slane %v1281, 4
      %v1284 = vor.u32 %v1283, %v1279
      %v1285 = vrot.slane %v1284, 4
      %v1287 = vshll.u32 %v1182, 16
      %v1289 = vrot.slane %v1287, 5
      %v1290 = vsel %vm200, %v1285, %v1289
      %v1292 = vshrl.u32 %v1183, 16
      %v1294 = vrot.slane %v1292, 4
      %v1295 = vshll.u32 %v1183, 16
      %v1297 = vrot.slane %v1295, 5
      %v1298 = vor.u32 %v1294, %v1297
      %v1299 = vrot.slane %v1298, 4
      %v1301 = vshll.u32 %v1184, 16
      %v1303 = vrot.slane %v1301, 5
      %v1304 = vsel %vm200, %v1299, %v1303
      %v1305 = vshrl.u32 %v1184, 16
      %v1307 = vrot.slane %v1305, 4
      %v1308 = vor.u32 %v1307, %v1303
      %v1309 = vrot.slane %v1308, 4
      %v1311 = vshll.u32 %v1185, 16
      %v1313 = vrot.slane %v1311, 5
      %v1314 = vsel %vm200, %v1309, %v1313
      %v1316 = vshrl.u32 %v1186, 16
      %v1318 = vrot.slane %v1316, 4
      %v1319 = vshll.u32 %v1186, 16
      %v1321 = vrot.slane %v1319, 5
      %v1322 = vor.u32 %v1318, %v1321
      %v1323 = vrot.slane %v1322, 4
      %v1325 = vshll.u32 %v1187, 16
      %v1327 = vrot.slane %v1325, 5
      %v1328 = vsel %vm200, %v1323, %v1327
      %v1329 = vshrl.u32 %v1187, 16
      %v1331 = vrot.slane %v1329, 4
      %v1332 = vor.u32 %v1331, %v1327
      %v1333 = vrot.slane %v1332, 4
      %v1335 = vshll.u32 %v1188, 16
      %v1337 = vrot.slane %v1335, 5
      %v1338 = vsel %vm200, %v1333, %v1337
      %v1340 = vshrl.u32 %v1189, 16
      %v1342 = vrot.slane %v1340, 4
      %v1343 = vshll.u32 %v1189, 16
      %v1345 = vrot.slane %v1343, 5
      %v1346 = vor.u32 %v1342, %v1345
      %v1347 = vrot.slane %v1346, 4
      %v1349 = vshll.u32 %v1190, 16
      %v1351 = vrot.slane %v1349, 5
      %v1352 = vsel %vm200, %v1347, %v1351
      %v1353 = vshrl.u32 %v1190, 16
      %v1355 = vrot.slane %v1353, 4
      %v1356 = vor.u32 %v1355, %v1351
      %v1357 = vrot.slane %v1356, 4
      %v1359 = vshll.u32 %v1191, 16
      %v1361 = vrot.slane %v1359, 5
      %v1362 = vsel %vm200, %v1357, %v1361
      %v1364 = vshrl.u32 %v1192, 16
      %v1366 = vrot.slane %v1364, 4
      %v1367 = vshll.u32 %v1192, 16
      %v1369 = vrot.slane %v1367, 5
      %v1370 = vor.u32 %v1366, %v1369
      %v1371 = vrot.slane %v1370, 4
      %v1373 = vshll.u32 %v1193, 16
      %v1375 = vrot.slane %v1373, 5
      %v1376 = vsel %vm200, %v1371, %v1375
      %v1377 = vshrl.u32 %v1193, 16
      %v1379 = vrot.slane %v1377, 4
      %v1380 = vor.u32 %v1379, %v1375
      %v1381 = vrot.slane %v1380, 4
      %v1383 = vshll.u32 %v1194, 16
      %v1385 = vrot.slane %v1383, 5
      %v1386 = vsel %vm200, %v1381, %v1385
      %s1387 = scalar_lea.vmem %s1, 32
      %v1388 = vld [vmem:[%s1387] sm:$0xf]
      %v1389 = vld [vmem:[%s1387 + $0x4] sm:$0xf]
      %v1390 = vunpack.c.l.b16 %v1208
      %v1391 = vunpack.c.l.b16 %v1218
      %v1392 = vunpack.c.l.b16 %v1232
      %v1393 = vunpack.c.l.b16 %v1242
      %v1394 = vunpack.c.l.b16 %v1256
      %v1395 = vunpack.c.l.b16 %v1266
      %v1396 = vunpack.c.l.b16 %v1280
      %v1397 = vunpack.c.l.b16 %v1290
      %v1398 = vunpack.c.l.b16 %v1304
      %v1399 = vunpack.c.l.b16 %v1314
      %v1400 = vunpack.c.l.b16 %v1328
      %v1401 = vunpack.c.l.b16 %v1338
      %v1402 = vunpack.c.l.b16 %v1352
      %v1403 = vunpack.c.l.b16 %v1362
      %v1404 = vunpack.c.l.b16 %v1376
      %v1405 = vunpack.c.l.b16 %v1386
      %v1406 = vpack.c.b16 %v1391, %v1390
      %v1407 = vpack.c.b16 %v1393, %v1392
      %v1408 = vpack.c.b16 %v1395, %v1394
      %v1409 = vpack.c.b16 %v1397, %v1396
      %v1410 = vpack.c.b16 %v1399, %v1398
      %v1411 = vpack.c.b16 %v1401, %v1400
      %v1412 = vpack.c.b16 %v1403, %v1402
      %v1413 = vpack.c.b16 %v1405, %v1404
      %v1416 = vunpack.c.l.b16 %v1388
      %v1417 = vunpack.c.l.b16 %v1389
      %v1418 = vpack.c.b16 %v1417, %v1416
      %v1421 = vsel %vm426, %v1406, 0
      %v1424 = vsel %vm426, %v1407, 0
      %v1427 = vsel %vm426, %v1408, 0
      %v1430 = vsel %vm426, %v1409, 0
      %v1433 = vsel %vm426, %v1410, 0
      %v1436 = vsel %vm426, %v1411, 0
      %v1439 = vsel %vm426, %v1412, 0
      %v1442 = vsel %vm426, %v1413, 0
      %1444 = vmatprep.subr.bf16.mxu0 0
      %1445 = vmatpush1.bf16.msra.mxu0 0
      %1446 = vmatprep.subr.bf16.mxu0 0
      %1447 = vmatpush1.bf16.msra.mxu0 0
      %1448 = vmatprep.subr.bf16.mxu0 0
      %1449 = vmatpush1.bf16.msra.mxu0 0
      %1450 = vmatprep.subr.bf16.mxu0 0
      %1451 = vmatpush1.bf16.msra.mxu0 0
      %1452 = vmatprep.subr.bf16.mxu0 0
      %1453 = vmatpush1.bf16.msra.mxu0 0
      %1454 = vmatprep.subr.bf16.mxu0 0
      %1455 = vmatpush1.bf16.msra.mxu0 0
      %1456 = vmatprep.subr.bf16.mxu0 0
      %1457 = vmatpush1.bf16.msra.mxu0 0
      %1458 = vmatprep.subr.bf16.mxu0 0
      %1459 = vmatpush1.bf16.msra.mxu0 %v1418
      %1460 = vmatprep.subr.bf16.mxu0 0
      %1461 = vmatpush2.bf16.msra.mxu0 0
      %1462 = vmatprep.subr.bf16.mxu0 0
      %1463 = vmatpush2.bf16.msra.mxu0 0
      %1464 = vmatprep.subr.bf16.mxu0 0
      %1465 = vmatpush2.bf16.msra.mxu0 0
      %1466 = vmatprep.subr.bf16.mxu0 0
      %1467 = vmatpush2.bf16.msra.mxu0 0
      %1468 = vmatprep.subr.bf16.mxu0 0
      %1469 = vmatpush2.bf16.msra.mxu0 0
      %1470 = vmatprep.subr.bf16.mxu0 0
      %1471 = vmatpush2.bf16.msra.mxu0 0
      %1472 = vmatprep.subr.bf16.mxu0 0
      %1473 = vmatpush2.bf16.msra.mxu0 0
      %1474 = vmatprep.subr.bf16.mxu0 0
      %1475 = vmatpush2.bf16.msra.mxu0 0
      %1476 = vmatprep.mubr.bf16.mxu0 0
      %1477 = vmatmul.mubr.bf16.gmra.mxu0 %v1421
      %v1478 = vpop.f32.mrf.mxu0
      %v1479 = vadd.f32 0.0, %v1478
      %v1480 = vpop.f32.mrf.mxu0
      %v1481 = vpop.f32.mrf.mxu0
      %v1482 = vadd.f32 0.0, %v1481
      %v1483 = vpop.f32.mrf.mxu0
      %1484 = vmatprep.mubr.bf16.mxu0 0
      %1485 = vmatmul.mubr.bf16.gmra.mxu0 %v1424
      %v1486 = vpop.f32.mrf.mxu0
      %v1487 = vadd.f32 0.0, %v1486
      %v1488 = vpop.f32.mrf.mxu0
      %v1489 = vpop.f32.mrf.mxu0
      %v1490 = vadd.f32 0.0, %v1489
      %v1491 = vpop.f32.mrf.mxu0
      %1492 = vmatprep.mubr.bf16.mxu0 0
      %1493 = vmatmul.mubr.bf16.gmra.mxu0 %v1427
      %v1494 = vpop.f32.mrf.mxu0
      %v1495 = vadd.f32 0.0, %v1494
      %v1496 = vpop.f32.mrf.mxu0
      %v1497 = vpop.f32.mrf.mxu0
      %v1498 = vadd.f32 0.0, %v1497
      %v1499 = vpop.f32.mrf.mxu0
      %1500 = vmatprep.mubr.bf16.mxu0 0
      %1501 = vmatmul.mubr.bf16.gmra.mxu0 %v1430
      %v1502 = vpop.f32.mrf.mxu0
      %v1503 = vadd.f32 0.0, %v1502
      %v1504 = vpop.f32.mrf.mxu0
      %v1505 = vpop.f32.mrf.mxu0
      %v1506 = vadd.f32 0.0, %v1505
      %v1507 = vpop.f32.mrf.mxu0
      %1508 = vmatprep.mubr.bf16.mxu0 0
      %1509 = vmatmul.mubr.bf16.gmra.mxu0 %v1433
      %v1510 = vpop.f32.mrf.mxu0
      %v1511 = vadd.f32 0.0, %v1510
      %v1512 = vpop.f32.mrf.mxu0
      %v1513 = vpop.f32.mrf.mxu0
      %v1514 = vadd.f32 0.0, %v1513
      %v1515 = vpop.f32.mrf.mxu0
      %1516 = vmatprep.mubr.bf16.mxu0 0
      %1517 = vmatmul.mubr.bf16.gmra.mxu0 %v1436
      %v1518 = vpop.f32.mrf.mxu0
      %v1519 = vadd.f32 0.0, %v1518
      %v1520 = vpop.f32.mrf.mxu0
      %v1521 = vpop.f32.mrf.mxu0
      %v1522 = vadd.f32 0.0, %v1521
      %v1523 = vpop.f32.mrf.mxu0
      %1524 = vmatprep.mubr.bf16.mxu0 0
      %1525 = vmatmul.mubr.bf16.gmra.mxu0 %v1439
      %v1526 = vpop.f32.mrf.mxu0
      %v1527 = vadd.f32 0.0, %v1526
      %v1528 = vpop.f32.mrf.mxu0
      %v1529 = vpop.f32.mrf.mxu0
      %v1530 = vadd.f32 0.0, %v1529
      %v1531 = vpop.f32.mrf.mxu0
      %1532 = vmatprep.mubr.bf16.mxu0 0
      %1533 = vmatmul.mubr.bf16.gmra.mxu0 %v1442
      %v1534 = vpop.f32.mrf.mxu0
      %v1535 = vadd.f32 0.0, %v1534
      %v1536 = vpop.f32.mrf.mxu0
      %v1537 = vpop.f32.mrf.mxu0
      %v1538 = vadd.f32 0.0, %v1537
      %v1539 = vpop.f32.mrf.mxu0
      %1540 = vdwg.mxu0
      %v1541 = vadd.f32 %v1155, %v1479
      %v1542 = vadd.f32 %v1156, %v1482
      %v1543 = vadd.f32 %v1157, %v1487
      %v1544 = vadd.f32 %v1158, %v1490
      %v1545 = vadd.f32 %v1159, %v1495
      %v1546 = vadd.f32 %v1160, %v1498
      %v1547 = vadd.f32 %v1161, %v1503
      %v1548 = vadd.f32 %v1162, %v1506
      %v1549 = vadd.f32 %v1163, %v1511
      %v1550 = vadd.f32 %v1164, %v1514
      %v1551 = vadd.f32 %v1165, %v1519
      %v1552 = vadd.f32 %v1166, %v1522
      %v1553 = vadd.f32 %v1167, %v1527
      %v1554 = vadd.f32 %v1168, %v1530
      %v1555 = vadd.f32 %v1169, %v1535
      %v1556 = vadd.f32 %v1170, %v1538
      %v1557 = vld [vmem:[%s968] sm:$0xe]
      %v1558 = vld [vmem:[%s968 + $0xc] sm:$0xe]
      %v1559 = vld [vmem:[%s968 + $0x18] sm:$0xe]
      %v1560 = vld [vmem:[%s968 + $0x24] sm:$0xe]
      %v1561 = vld [vmem:[%s968 + $0x30] sm:$0xe]
      %v1562 = vld [vmem:[%s968 + $0x3c] sm:$0xe]
      %v1563 = vld [vmem:[%s968 + $0x48] sm:$0xe]
      %v1564 = vld [vmem:[%s968 + $0x54] sm:$0xe]
      %v1589 = vrot.slane %v1557, 5
      %v1590 = vrot.slane %v1589, 4
      %v1591 = vrot.slane %v1172, 5
      %v1592 = vsel %vm741, %v1590, %v1591
      %v1593 = vrot.slane %v1591, 4
      %v1594 = vrot.slane %v1173, 5
      %v1595 = vsel %vm741, %v1593, %v1594
      %v1596 = vrot.slane %v1558, 5
      %v1597 = vrot.slane %v1596, 4
      %v1598 = vrot.slane %v1175, 5
      %v1599 = vsel %vm741, %v1597, %v1598
      %v1600 = vrot.slane %v1598, 4
      %v1601 = vrot.slane %v1176, 5
      %v1602 = vsel %vm741, %v1600, %v1601
      %v1603 = vrot.slane %v1559, 5
      %v1604 = vrot.slane %v1603, 4
      %v1605 = vrot.slane %v1178, 5
      %v1606 = vsel %vm741, %v1604, %v1605
      %v1607 = vrot.slane %v1605, 4
      %v1608 = vrot.slane %v1179, 5
      %v1609 = vsel %vm741, %v1607, %v1608
      %v1610 = vrot.slane %v1560, 5
      %v1611 = vrot.slane %v1610, 4
      %v1612 = vrot.slane %v1181, 5
      %v1613 = vsel %vm741, %v1611, %v1612
      %v1614 = vrot.slane %v1612, 4
      %v1615 = vrot.slane %v1182, 5
      %v1616 = vsel %vm741, %v1614, %v1615
      %v1617 = vrot.slane %v1561, 5
      %v1618 = vrot.slane %v1617, 4
      %v1619 = vrot.slane %v1184, 5
      %v1620 = vsel %vm741, %v1618, %v1619
      %v1621 = vrot.slane %v1619, 4
      %v1622 = vrot.slane %v1185, 5
      %v1623 = vsel %vm741, %v1621, %v1622
      %v1624 = vrot.slane %v1562, 5
      %v1625 = vrot.slane %v1624, 4
      %v1626 = vrot.slane %v1187, 5
      %v1627 = vsel %vm741, %v1625, %v1626
      %v1628 = vrot.slane %v1626, 4
      %v1629 = vrot.slane %v1188, 5
      %v1630 = vsel %vm741, %v1628, %v1629
      %v1631 = vrot.slane %v1563, 5
      %v1632 = vrot.slane %v1631, 4
      %v1633 = vrot.slane %v1190, 5
      %v1634 = vsel %vm741, %v1632, %v1633
      %v1635 = vrot.slane %v1633, 4
      %v1636 = vrot.slane %v1191, 5
      %v1637 = vsel %vm741, %v1635, %v1636
      %v1638 = vrot.slane %v1564, 5
      %v1639 = vrot.slane %v1638, 4
      %v1640 = vrot.slane %v1193, 5
      %v1641 = vsel %vm741, %v1639, %v1640
      %v1642 = vrot.slane %v1640, 4
      %v1643 = vrot.slane %v1194, 5
      %v1644 = vsel %vm741, %v1642, %v1643
      %s1645 = scalar_lea.vmem %s1, 40
      %v1646 = vld [vmem:[%s1645] sm:$0xf]
      %v1647 = vld [vmem:[%s1645 + $0x4] sm:$0xf]
      %v1648 = vunpack.c.l.b16 %v1592
      %v1649 = vunpack.c.l.b16 %v1595
      %v1650 = vunpack.c.l.b16 %v1599
      %v1651 = vunpack.c.l.b16 %v1602
      %v1652 = vunpack.c.l.b16 %v1606
      %v1653 = vunpack.c.l.b16 %v1609
      %v1654 = vunpack.c.l.b16 %v1613
      %v1655 = vunpack.c.l.b16 %v1616
      %v1656 = vunpack.c.l.b16 %v1620
      %v1657 = vunpack.c.l.b16 %v1623
      %v1658 = vunpack.c.l.b16 %v1627
      %v1659 = vunpack.c.l.b16 %v1630
      %v1660 = vunpack.c.l.b16 %v1634
      %v1661 = vunpack.c.l.b16 %v1637
      %v1662 = vunpack.c.l.b16 %v1641
      %v1663 = vunpack.c.l.b16 %v1644
      %v1664 = vpack.c.b16 %v1649, %v1648
      %v1665 = vpack.c.b16 %v1651, %v1650
      %v1666 = vpack.c.b16 %v1653, %v1652
      %v1667 = vpack.c.b16 %v1655, %v1654
      %v1668 = vpack.c.b16 %v1657, %v1656
      %v1669 = vpack.c.b16 %v1659, %v1658
      %v1670 = vpack.c.b16 %v1661, %v1660
      %v1671 = vpack.c.b16 %v1663, %v1662
      %v1674 = vunpack.c.l.b16 %v1646
      %v1675 = vunpack.c.l.b16 %v1647
      %v1676 = vpack.c.b16 %v1675, %v1674
      %v1679 = vsel %vm426, %v1664, 0
      %v1682 = vsel %vm426, %v1665, 0
      %v1685 = vsel %vm426, %v1666, 0
      %v1688 = vsel %vm426, %v1667, 0
      %v1691 = vsel %vm426, %v1668, 0
      %v1694 = vsel %vm426, %v1669, 0
      %v1697 = vsel %vm426, %v1670, 0
      %v1700 = vsel %vm426, %v1671, 0
      %1702 = vmatprep.subr.bf16.mxu0 0
      %1703 = vmatpush1.bf16.msra.mxu0 0
      %1704 = vmatprep.subr.bf16.mxu0 0
      %1705 = vmatpush1.bf16.msra.mxu0 0
      %1706 = vmatprep.subr.bf16.mxu0 0
      %1707 = vmatpush1.bf16.msra.mxu0 0
      %1708 = vmatprep.subr.bf16.mxu0 0
      %1709 = vmatpush1.bf16.msra.mxu0 0
      %1710 = vmatprep.subr.bf16.mxu0 0
      %1711 = vmatpush1.bf16.msra.mxu0 0
      %1712 = vmatprep.subr.bf16.mxu0 0
      %1713 = vmatpush1.bf16.msra.mxu0 0
      %1714 = vmatprep.subr.bf16.mxu0 0
      %1715 = vmatpush1.bf16.msra.mxu0 0
      %1716 = vmatprep.subr.bf16.mxu0 0
      %1717 = vmatpush1.bf16.msra.mxu0 %v1676
      %1718 = vmatprep.subr.bf16.mxu0 0
      %1719 = vmatpush2.bf16.msra.mxu0 0
      %1720 = vmatprep.subr.bf16.mxu0 0
      %1721 = vmatpush2.bf16.msra.mxu0 0
      %1722 = vmatprep.subr.bf16.mxu0 0
      %1723 = vmatpush2.bf16.msra.mxu0 0
      %1724 = vmatprep.subr.bf16.mxu0 0
      %1725 = vmatpush2.bf16.msra.mxu0 0
      %1726 = vmatprep.subr.bf16.mxu0 0
      %1727 = vmatpush2.bf16.msra.mxu0 0
      %1728 = vmatprep.subr.bf16.mxu0 0
      %1729 = vmatpush2.bf16.msra.mxu0 0
      %1730 = vmatprep.subr.bf16.mxu0 0
      %1731 = vmatpush2.bf16.msra.mxu0 0
      %1732 = vmatprep.subr.bf16.mxu0 0
      %1733 = vmatpush2.bf16.msra.mxu0 0
      %1734 = vmatprep.mubr.bf16.mxu0 0
      %1735 = vmatmul.mubr.bf16.gmra.mxu0 %v1679
      %v1736 = vpop.f32.mrf.mxu0
      %v1737 = vadd.f32 0.0, %v1736
      %v1738 = vpop.f32.mrf.mxu0
      %v1739 = vpop.f32.mrf.mxu0
      %v1740 = vadd.f32 0.0, %v1739
      %v1741 = vpop.f32.mrf.mxu0
      %1742 = vmatprep.mubr.bf16.mxu0 0
      %1743 = vmatmul.mubr.bf16.gmra.mxu0 %v1682
      %v1744 = vpop.f32.mrf.mxu0
      %v1745 = vadd.f32 0.0, %v1744
      %v1746 = vpop.f32.mrf.mxu0
      %v1747 = vpop.f32.mrf.mxu0
      %v1748 = vadd.f32 0.0, %v1747
      %v1749 = vpop.f32.mrf.mxu0
      %1750 = vmatprep.mubr.bf16.mxu0 0
      %1751 = vmatmul.mubr.bf16.gmra.mxu0 %v1685
      %v1752 = vpop.f32.mrf.mxu0
      %v1753 = vadd.f32 0.0, %v1752
      %v1754 = vpop.f32.mrf.mxu0
      %v1755 = vpop.f32.mrf.mxu0
      %v1756 = vadd.f32 0.0, %v1755
      %v1757 = vpop.f32.mrf.mxu0
      %1758 = vmatprep.mubr.bf16.mxu0 0
      %1759 = vmatmul.mubr.bf16.gmra.mxu0 %v1688
      %v1760 = vpop.f32.mrf.mxu0
      %v1761 = vadd.f32 0.0, %v1760
      %v1762 = vpop.f32.mrf.mxu0
      %v1763 = vpop.f32.mrf.mxu0
      %v1764 = vadd.f32 0.0, %v1763
      %v1765 = vpop.f32.mrf.mxu0
      %1766 = vmatprep.mubr.bf16.mxu0 0
      %1767 = vmatmul.mubr.bf16.gmra.mxu0 %v1691
      %v1768 = vpop.f32.mrf.mxu0
      %v1769 = vadd.f32 0.0, %v1768
      %v1770 = vpop.f32.mrf.mxu0
      %v1771 = vpop.f32.mrf.mxu0
      %v1772 = vadd.f32 0.0, %v1771
      %v1773 = vpop.f32.mrf.mxu0
      %1774 = vmatprep.mubr.bf16.mxu0 0
      %1775 = vmatmul.mubr.bf16.gmra.mxu0 %v1694
      %v1776 = vpop.f32.mrf.mxu0
      %v1777 = vadd.f32 0.0, %v1776
      %v1778 = vpop.f32.mrf.mxu0
      %v1779 = vpop.f32.mrf.mxu0
      %v1780 = vadd.f32 0.0, %v1779
      %v1781 = vpop.f32.mrf.mxu0
      %1782 = vmatprep.mubr.bf16.mxu0 0
      %1783 = vmatmul.mubr.bf16.gmra.mxu0 %v1697
      %v1784 = vpop.f32.mrf.mxu0
      %v1785 = vadd.f32 0.0, %v1784
      %v1786 = vpop.f32.mrf.mxu0
      %v1787 = vpop.f32.mrf.mxu0
      %v1788 = vadd.f32 0.0, %v1787
      %v1789 = vpop.f32.mrf.mxu0
      %1790 = vmatprep.mubr.bf16.mxu0 0
      %1791 = vmatmul.mubr.bf16.gmra.mxu0 %v1700
      %v1792 = vpop.f32.mrf.mxu0
      %v1793 = vadd.f32 0.0, %v1792
      %v1794 = vpop.f32.mrf.mxu0
      %v1795 = vpop.f32.mrf.mxu0
      %v1796 = vadd.f32 0.0, %v1795
      %v1797 = vpop.f32.mrf.mxu0
      %1798 = vdwg.mxu0
      %v1799 = vadd.f32 %v1541, %v1737
      %v1800 = vadd.f32 %v1542, %v1740
      %v1801 = vadd.f32 %v1543, %v1745
      %v1802 = vadd.f32 %v1544, %v1748
      %v1803 = vadd.f32 %v1545, %v1753
      %v1804 = vadd.f32 %v1546, %v1756
      %v1805 = vadd.f32 %v1547, %v1761
      %v1806 = vadd.f32 %v1548, %v1764
      %v1807 = vadd.f32 %v1549, %v1769
      %v1808 = vadd.f32 %v1550, %v1772
      %v1809 = vadd.f32 %v1551, %v1777
      %v1810 = vadd.f32 %v1552, %v1780
      %v1811 = vadd.f32 %v1553, %v1785
      %v1812 = vadd.f32 %v1554, %v1788
      %v1813 = vadd.f32 %v1555, %v1793
      %v1814 = vadd.f32 %v1556, %v1796
      %s1815 = scalar_lea.vmem %s165, 24
      %v1816 = vld [vmem:[%s1815] sm:$0xf]
      %v1817 = vld [vmem:[%s1815 + $0x4] sm:$0xf]
      %v1818 = vld [vmem:[%s1815 + $0xc] sm:$0xf]
      %v1819 = vld [vmem:[%s1815 + $0x10] sm:$0xf]
      %v1820 = vld [vmem:[%s1815 + $0x18] sm:$0xf]
      %v1821 = vld [vmem:[%s1815 + $0x1c] sm:$0xf]
      %v1822 = vld [vmem:[%s1815 + $0x24] sm:$0xf]
      %v1823 = vld [vmem:[%s1815 + $0x28] sm:$0xf]
      %v1824 = vld [vmem:[%s1815 + $0x30] sm:$0xf]
      %v1825 = vld [vmem:[%s1815 + $0x34] sm:$0xf]
      %v1826 = vld [vmem:[%s1815 + $0x3c] sm:$0xf]
      %v1827 = vld [vmem:[%s1815 + $0x40] sm:$0xf]
      %v1828 = vld [vmem:[%s1815 + $0x48] sm:$0xf]
      %v1829 = vld [vmem:[%s1815 + $0x4c] sm:$0xf]
      %v1830 = vld [vmem:[%s1815 + $0x54] sm:$0xf]
      %v1831 = vld [vmem:[%s1815 + $0x58] sm:$0xf]
      %s1832 = scalar_lea.vmem %s1, 48
      %v1833 = vld [vmem:[%s1832] sm:$0xf]
      %v1834 = vld [vmem:[%s1832 + $0x4] sm:$0xf]
      %v1851 = vunpack.c.l.b16 %v1816
      %v1852 = vunpack.c.l.b16 %v1817
      %v1853 = vunpack.c.l.b16 %v1818
      %v1854 = vunpack.c.l.b16 %v1819
      %v1855 = vunpack.c.l.b16 %v1820
      %v1856 = vunpack.c.l.b16 %v1821
      %v1857 = vunpack.c.l.b16 %v1822
      %v1858 = vunpack.c.l.b16 %v1823
      %v1859 = vunpack.c.l.b16 %v1824
      %v1860 = vunpack.c.l.b16 %v1825
      %v1861 = vunpack.c.l.b16 %v1826
      %v1862 = vunpack.c.l.b16 %v1827
      %v1863 = vunpack.c.l.b16 %v1828
      %v1864 = vunpack.c.l.b16 %v1829
      %v1865 = vunpack.c.l.b16 %v1830
      %v1866 = vunpack.c.l.b16 %v1831
      %v1867 = vpack.c.b16 %v1852, %v1851
      %v1868 = vpack.c.b16 %v1854, %v1853
      %v1869 = vpack.c.b16 %v1856, %v1855
      %v1870 = vpack.c.b16 %v1858, %v1857
      %v1871 = vpack.c.b16 %v1860, %v1859
      %v1872 = vpack.c.b16 %v1862, %v1861
      %v1873 = vpack.c.b16 %v1864, %v1863
      %v1874 = vpack.c.b16 %v1866, %v1865
      %v1877 = vunpack.c.l.b16 %v1833
      %v1878 = vunpack.c.l.b16 %v1834
      %v1879 = vpack.c.b16 %v1878, %v1877
      %v1882 = vsel %vm426, %v1867, 0
      %v1885 = vsel %vm426, %v1868, 0
      %v1888 = vsel %vm426, %v1869, 0
      %v1891 = vsel %vm426, %v1870, 0
      %v1894 = vsel %vm426, %v1871, 0
      %v1897 = vsel %vm426, %v1872, 0
      %v1900 = vsel %vm426, %v1873, 0
      %v1903 = vsel %vm426, %v1874, 0
      %1905 = vmatprep.subr.bf16.mxu0 0
      %1906 = vmatpush1.bf16.msra.mxu0 0
      %1907 = vmatprep.subr.bf16.mxu0 0
      %1908 = vmatpush1.bf16.msra.mxu0 0
      %1909 = vmatprep.subr.bf16.mxu0 0
      %1910 = vmatpush1.bf16.msra.mxu0 0
      %1911 = vmatprep.subr.bf16.mxu0 0
      %1912 = vmatpush1.bf16.msra.mxu0 0
      %1913 = vmatprep.subr.bf16.mxu0 0
      %1914 = vmatpush1.bf16.msra.mxu0 0
      %1915 = vmatprep.subr.bf16.mxu0 0
      %1916 = vmatpush1.bf16.msra.mxu0 0
      %1917 = vmatprep.subr.bf16.mxu0 0
      %1918 = vmatpush1.bf16.msra.mxu0 0
      %1919 = vmatprep.subr.bf16.mxu0 0
      %1920 = vmatpush1.bf16.msra.mxu0 %v1879
      %1921 = vmatprep.subr.bf16.mxu0 0
      %1922 = vmatpush2.bf16.msra.mxu0 0
      %1923 = vmatprep.subr.bf16.mxu0 0
      %1924 = vmatpush2.bf16.msra.mxu0 0
      %1925 = vmatprep.subr.bf16.mxu0 0
      %1926 = vmatpush2.bf16.msra.mxu0 0
      %1927 = vmatprep.subr.bf16.mxu0 0
      %1928 = vmatpush2.bf16.msra.mxu0 0
      %1929 = vmatprep.subr.bf16.mxu0 0
      %1930 = vmatpush2.bf16.msra.mxu0 0
      %1931 = vmatprep.subr.bf16.mxu0 0
      %1932 = vmatpush2.bf16.msra.mxu0 0
      %1933 = vmatprep.subr.bf16.mxu0 0
      %1934 = vmatpush2.bf16.msra.mxu0 0
      %1935 = vmatprep.subr.bf16.mxu0 0
      %1936 = vmatpush2.bf16.msra.mxu0 0
      %1937 = vmatprep.mubr.bf16.mxu0 0
      %1938 = vmatmul.mubr.bf16.gmra.mxu0 %v1882
      %v1939 = vpop.f32.mrf.mxu0
      %v1940 = vadd.f32 0.0, %v1939
      %v1941 = vpop.f32.mrf.mxu0
      %v1942 = vpop.f32.mrf.mxu0
      %v1943 = vadd.f32 0.0, %v1942
      %v1944 = vpop.f32.mrf.mxu0
      %1945 = vmatprep.mubr.bf16.mxu0 0
      %1946 = vmatmul.mubr.bf16.gmra.mxu0 %v1885
      %v1947 = vpop.f32.mrf.mxu0
      %v1948 = vadd.f32 0.0, %v1947
      %v1949 = vpop.f32.mrf.mxu0
      %v1950 = vpop.f32.mrf.mxu0
      %v1951 = vadd.f32 0.0, %v1950
      %v1952 = vpop.f32.mrf.mxu0
      %1953 = vmatprep.mubr.bf16.mxu0 0
      %1954 = vmatmul.mubr.bf16.gmra.mxu0 %v1888
      %v1955 = vpop.f32.mrf.mxu0
      %v1956 = vadd.f32 0.0, %v1955
      %v1957 = vpop.f32.mrf.mxu0
      %v1958 = vpop.f32.mrf.mxu0
      %v1959 = vadd.f32 0.0, %v1958
      %v1960 = vpop.f32.mrf.mxu0
      %1961 = vmatprep.mubr.bf16.mxu0 0
      %1962 = vmatmul.mubr.bf16.gmra.mxu0 %v1891
      %v1963 = vpop.f32.mrf.mxu0
      %v1964 = vadd.f32 0.0, %v1963
      %v1965 = vpop.f32.mrf.mxu0
      %v1966 = vpop.f32.mrf.mxu0
      %v1967 = vadd.f32 0.0, %v1966
      %v1968 = vpop.f32.mrf.mxu0
      %1969 = vmatprep.mubr.bf16.mxu0 0
      %1970 = vmatmul.mubr.bf16.gmra.mxu0 %v1894
      %v1971 = vpop.f32.mrf.mxu0
      %v1972 = vadd.f32 0.0, %v1971
      %v1973 = vpop.f32.mrf.mxu0
      %v1974 = vpop.f32.mrf.mxu0
      %v1975 = vadd.f32 0.0, %v1974
      %v1976 = vpop.f32.mrf.mxu0
      %1977 = vmatprep.mubr.bf16.mxu0 0
      %1978 = vmatmul.mubr.bf16.gmra.mxu0 %v1897
      %v1979 = vpop.f32.mrf.mxu0
      %v1980 = vadd.f32 0.0, %v1979
      %v1981 = vpop.f32.mrf.mxu0
      %v1982 = vpop.f32.mrf.mxu0
      %v1983 = vadd.f32 0.0, %v1982
      %v1984 = vpop.f32.mrf.mxu0
      %1985 = vmatprep.mubr.bf16.mxu0 0
      %1986 = vmatmul.mubr.bf16.gmra.mxu0 %v1900
      %v1987 = vpop.f32.mrf.mxu0
      %v1988 = vadd.f32 0.0, %v1987
      %v1989 = vpop.f32.mrf.mxu0
      %v1990 = vpop.f32.mrf.mxu0
      %v1991 = vadd.f32 0.0, %v1990
      %v1992 = vpop.f32.mrf.mxu0
      %1993 = vmatprep.mubr.bf16.mxu0 0
      %1994 = vmatmul.mubr.bf16.gmra.mxu0 %v1903
      %v1995 = vpop.f32.mrf.mxu0
      %v1996 = vadd.f32 0.0, %v1995
      %v1997 = vpop.f32.mrf.mxu0
      %v1998 = vpop.f32.mrf.mxu0
      %v1999 = vadd.f32 0.0, %v1998
      %v2000 = vpop.f32.mrf.mxu0
      %2001 = vdwg.mxu0
      %v2002 = vadd.f32 %v1799, %v1940
      %v2003 = vadd.f32 %v1800, %v1943
      %v2004 = vadd.f32 %v1801, %v1948
      %v2005 = vadd.f32 %v1802, %v1951
      %v2006 = vadd.f32 %v1803, %v1956
      %v2007 = vadd.f32 %v1804, %v1959
      %v2008 = vadd.f32 %v1805, %v1964
      %v2009 = vadd.f32 %v1806, %v1967
      %v2010 = vadd.f32 %v1807, %v1972
      %v2011 = vadd.f32 %v1808, %v1975
      %v2012 = vadd.f32 %v1809, %v1980
      %v2013 = vadd.f32 %v1810, %v1983
      %v2014 = vadd.f32 %v1811, %v1988
      %v2015 = vadd.f32 %v1812, %v1991
      %v2016 = vadd.f32 %v1813, %v1996
      %v2017 = vadd.f32 %v1814, %v1999
      %v2018 = vld [vmem:[%s1815] sm:$0xf]
      %v2019 = vld [vmem:[%s1815 + $0x4] sm:$0xf]
      %v2020 = vld [vmem:[%s1815 + $0x8] sm:$0x1]
      %v2021 = vld [vmem:[%s1815 + $0xc] sm:$0xf]
      %v2022 = vld [vmem:[%s1815 + $0x10] sm:$0xf]
      %v2023 = vld [vmem:[%s1815 + $0x14] sm:$0x1]
      %v2024 = vld [vmem:[%s1815 + $0x18] sm:$0xf]
      %v2025 = vld [vmem:[%s1815 + $0x1c] sm:$0xf]
      %v2026 = vld [vmem:[%s1815 + $0x20] sm:$0x1]
      %v2027 = vld [vmem:[%s1815 + $0x24] sm:$0xf]
      %v2028 = vld [vmem:[%s1815 + $0x28] sm:$0xf]
      %v2029 = vld [vmem:[%s1815 + $0x2c] sm:$0x1]
      %v2030 = vld [vmem:[%s1815 + $0x30] sm:$0xf]
      %v2031 = vld [vmem:[%s1815 + $0x34] sm:$0xf]
      %v2032 = vld [vmem:[%s1815 + $0x38] sm:$0x1]
      %v2033 = vld [vmem:[%s1815 + $0x3c] sm:$0xf]
      %v2034 = vld [vmem:[%s1815 + $0x40] sm:$0xf]
      %v2035 = vld [vmem:[%s1815 + $0x44] sm:$0x1]
      %v2036 = vld [vmem:[%s1815 + $0x48] sm:$0xf]
      %v2037 = vld [vmem:[%s1815 + $0x4c] sm:$0xf]
      %v2038 = vld [vmem:[%s1815 + $0x50] sm:$0x1]
      %v2039 = vld [vmem:[%s1815 + $0x54] sm:$0xf]
      %v2040 = vld [vmem:[%s1815 + $0x58] sm:$0xf]
      %v2041 = vld [vmem:[%s1815 + $0x5c] sm:$0x1]
      %v2043 = vshrl.u32 %v2018, 16
      %v2045 = vrot.slane %v2043, 4
      %v2046 = vshll.u32 %v2018, 16
      %v2048 = vrot.slane %v2046, 5
      %v2049 = vor.u32 %v2045, %v2048
      %v2050 = vrot.slane %v2049, 4
      %v2052 = vshll.u32 %v2019, 16
      %v2054 = vrot.slane %v2052, 5
      %v2055 = vsel %vm200, %v2050, %v2054
      %v2056 = vshrl.u32 %v2019, 16
      %v2058 = vrot.slane %v2056, 4
      %v2059 = vor.u32 %v2058, %v2054
      %v2060 = vrot.slane %v2059, 4
      %v2062 = vshll.u32 %v2020, 16
      %v2064 = vrot.slane %v2062, 5
      %v2065 = vsel %vm200, %v2060, %v2064
      %v2067 = vshrl.u32 %v2021, 16
      %v2069 = vrot.slane %v2067, 4
      %v2070 = vshll.u32 %v2021, 16
      %v2072 = vrot.slane %v2070, 5
      %v2073 = vor.u32 %v2069, %v2072
      %v2074 = vrot.slane %v2073, 4
      %v2076 = vshll.u32 %v2022, 16
      %v2078 = vrot.slane %v2076, 5
      %v2079 = vsel %vm200, %v2074, %v2078
      %v2080 = vshrl.u32 %v2022, 16
      %v2082 = vrot.slane %v2080, 4
      %v2083 = vor.u32 %v2082, %v2078
      %v2084 = vrot.slane %v2083, 4
      %v2086 = vshll.u32 %v2023, 16
      %v2088 = vrot.slane %v2086, 5
      %v2089 = vsel %vm200, %v2084, %v2088
      %v2091 = vshrl.u32 %v2024, 16
      %v2093 = vrot.slane %v2091, 4
      %v2094 = vshll.u32 %v2024, 16
      %v2096 = vrot.slane %v2094, 5
      %v2097 = vor.u32 %v2093, %v2096
      %v2098 = vrot.slane %v2097, 4
      %v2100 = vshll.u32 %v2025, 16
      %v2102 = vrot.slane %v2100, 5
      %v2103 = vsel %vm200, %v2098, %v2102
      %v2104 = vshrl.u32 %v2025, 16
      %v2106 = vrot.slane %v2104, 4
      %v2107 = vor.u32 %v2106, %v2102
      %v2108 = vrot.slane %v2107, 4
      %v2110 = vshll.u32 %v2026, 16
      %v2112 = vrot.slane %v2110, 5
      %v2113 = vsel %vm200, %v2108, %v2112
      %v2115 = vshrl.u32 %v2027, 16
      %v2117 = vrot.slane %v2115, 4
      %v2118 = vshll.u32 %v2027, 16
      %v2120 = vrot.slane %v2118, 5
      %v2121 = vor.u32 %v2117, %v2120
      %v2122 = vrot.slane %v2121, 4
      %v2124 = vshll.u32 %v2028, 16
      %v2126 = vrot.slane %v2124, 5
      %v2127 = vsel %vm200, %v2122, %v2126
      %v2128 = vshrl.u32 %v2028, 16
      %v2130 = vrot.slane %v2128, 4
      %v2131 = vor.u32 %v2130, %v2126
      %v2132 = vrot.slane %v2131, 4
      %v2134 = vshll.u32 %v2029, 16
      %v2136 = vrot.slane %v2134, 5
      %v2137 = vsel %vm200, %v2132, %v2136
      %v2139 = vshrl.u32 %v2030, 16
      %v2141 = vrot.slane %v2139, 4
      %v2142 = vshll.u32 %v2030, 16
      %v2144 = vrot.slane %v2142, 5
      %v2145 = vor.u32 %v2141, %v2144
      %v2146 = vrot.slane %v2145, 4
      %v2148 = vshll.u32 %v2031, 16
      %v2150 = vrot.slane %v2148, 5
      %v2151 = vsel %vm200, %v2146, %v2150
      %v2152 = vshrl.u32 %v2031, 16
      %v2154 = vrot.slane %v2152, 4
      %v2155 = vor.u32 %v2154, %v2150
      %v2156 = vrot.slane %v2155, 4
      %v2158 = vshll.u32 %v2032, 16
      %v2160 = vrot.slane %v2158, 5
      %v2161 = vsel %vm200, %v2156, %v2160
      %v2163 = vshrl.u32 %v2033, 16
      %v2165 = vrot.slane %v2163, 4
      %v2166 = vshll.u32 %v2033, 16
      %v2168 = vrot.slane %v2166, 5
      %v2169 = vor.u32 %v2165, %v2168
      %v2170 = vrot.slane %v2169, 4
      %v2172 = vshll.u32 %v2034, 16
      %v2174 = vrot.slane %v2172, 5
      %v2175 = vsel %vm200, %v2170, %v2174
      %v2176 = vshrl.u32 %v2034, 16
      %v2178 = vrot.slane %v2176, 4
      %v2179 = vor.u32 %v2178, %v2174
      %v2180 = vrot.slane %v2179, 4
      %v2182 = vshll.u32 %v2035, 16
      %v2184 = vrot.slane %v2182, 5
      %v2185 = vsel %vm200, %v2180, %v2184
      %v2187 = vshrl.u32 %v2036, 16
      %v2189 = vrot.slane %v2187, 4
      %v2190 = vshll.u32 %v2036, 16
      %v2192 = vrot.slane %v2190, 5
      %v2193 = vor.u32 %v2189, %v2192
      %v2194 = vrot.slane %v2193, 4
      %v2196 = vshll.u32 %v2037, 16
      %v2198 = vrot.slane %v2196, 5
      %v2199 = vsel %vm200, %v2194, %v2198
      %v2200 = vshrl.u32 %v2037, 16
      %v2202 = vrot.slane %v2200, 4
      %v2203 = vor.u32 %v2202, %v2198
      %v2204 = vrot.slane %v2203, 4
      %v2206 = vshll.u32 %v2038, 16
      %v2208 = vrot.slane %v2206, 5
      %v2209 = vsel %vm200, %v2204, %v2208
      %v2211 = vshrl.u32 %v2039, 16
      %v2213 = vrot.slane %v2211, 4
      %v2214 = vshll.u32 %v2039, 16
      %v2216 = vrot.slane %v2214, 5
      %v2217 = vor.u32 %v2213, %v2216
      %v2218 = vrot.slane %v2217, 4
      %v2220 = vshll.u32 %v2040, 16
      %v2222 = vrot.slane %v2220, 5
      %v2223 = vsel %vm200, %v2218, %v2222
      %v2224 = vshrl.u32 %v2040, 16
      %v2226 = vrot.slane %v2224, 4
      %v2227 = vor.u32 %v2226, %v2222
      %v2228 = vrot.slane %v2227, 4
      %v2230 = vshll.u32 %v2041, 16
      %v2232 = vrot.slane %v2230, 5
      %v2233 = vsel %vm200, %v2228, %v2232
      %s2234 = scalar_lea.vmem %s1, 56
      %v2235 = vld [vmem:[%s2234] sm:$0xf]
      %v2236 = vld [vmem:[%s2234 + $0x4] sm:$0xf]
      %v2237 = vunpack.c.l.b16 %v2055
      %v2238 = vunpack.c.l.b16 %v2065
      %v2239 = vunpack.c.l.b16 %v2079
      %v2240 = vunpack.c.l.b16 %v2089
      %v2241 = vunpack.c.l.b16 %v2103
      %v2242 = vunpack.c.l.b16 %v2113
      %v2243 = vunpack.c.l.b16 %v2127
      %v2244 = vunpack.c.l.b16 %v2137
      %v2245 = vunpack.c.l.b16 %v2151
      %v2246 = vunpack.c.l.b16 %v2161
      %v2247 = vunpack.c.l.b16 %v2175
      %v2248 = vunpack.c.l.b16 %v2185
      %v2249 = vunpack.c.l.b16 %v2199
      %v2250 = vunpack.c.l.b16 %v2209
      %v2251 = vunpack.c.l.b16 %v2223
      %v2252 = vunpack.c.l.b16 %v2233
      %v2253 = vpack.c.b16 %v2238, %v2237
      %v2254 = vpack.c.b16 %v2240, %v2239
      %v2255 = vpack.c.b16 %v2242, %v2241
      %v2256 = vpack.c.b16 %v2244, %v2243
      %v2257 = vpack.c.b16 %v2246, %v2245
      %v2258 = vpack.c.b16 %v2248, %v2247
      %v2259 = vpack.c.b16 %v2250, %v2249
      %v2260 = vpack.c.b16 %v2252, %v2251
      %v2263 = vunpack.c.l.b16 %v2235
      %v2264 = vunpack.c.l.b16 %v2236
      %v2265 = vpack.c.b16 %v2264, %v2263
      %v2268 = vsel %vm426, %v2253, 0
      %v2271 = vsel %vm426, %v2254, 0
      %v2274 = vsel %vm426, %v2255, 0
      %v2277 = vsel %vm426, %v2256, 0
      %v2280 = vsel %vm426, %v2257, 0
      %v2283 = vsel %vm426, %v2258, 0
      %v2286 = vsel %vm426, %v2259, 0
      %v2289 = vsel %vm426, %v2260, 0
      %2291 = vmatprep.subr.bf16.mxu0 0
      %2292 = vmatpush1.bf16.msra.mxu0 0
      %2293 = vmatprep.subr.bf16.mxu0 0
      %2294 = vmatpush1.bf16.msra.mxu0 0
      %2295 = vmatprep.subr.bf16.mxu0 0
      %2296 = vmatpush1.bf16.msra.mxu0 0
      %2297 = vmatprep.subr.bf16.mxu0 0
      %2298 = vmatpush1.bf16.msra.mxu0 0
      %2299 = vmatprep.subr.bf16.mxu0 0
      %2300 = vmatpush1.bf16.msra.mxu0 0
      %2301 = vmatprep.subr.bf16.mxu0 0
      %2302 = vmatpush1.bf16.msra.mxu0 0
      %2303 = vmatprep.subr.bf16.mxu0 0
      %2304 = vmatpush1.bf16.msra.mxu0 0
      %2305 = vmatprep.subr.bf16.mxu0 0
      %2306 = vmatpush1.bf16.msra.mxu0 %v2265
      %2307 = vmatprep.subr.bf16.mxu0 0
      %2308 = vmatpush2.bf16.msra.mxu0 0
      %2309 = vmatprep.subr.bf16.mxu0 0
      %2310 = vmatpush2.bf16.msra.mxu0 0
      %2311 = vmatprep.subr.bf16.mxu0 0
      %2312 = vmatpush2.bf16.msra.mxu0 0
      %2313 = vmatprep.subr.bf16.mxu0 0
      %2314 = vmatpush2.bf16.msra.mxu0 0
      %2315 = vmatprep.subr.bf16.mxu0 0
      %2316 = vmatpush2.bf16.msra.mxu0 0
      %2317 = vmatprep.subr.bf16.mxu0 0
      %2318 = vmatpush2.bf16.msra.mxu0 0
      %2319 = vmatprep.subr.bf16.mxu0 0
      %2320 = vmatpush2.bf16.msra.mxu0 0
      %2321 = vmatprep.subr.bf16.mxu0 0
      %2322 = vmatpush2.bf16.msra.mxu0 0
      %2323 = vmatprep.mubr.bf16.mxu0 0
      %2324 = vmatmul.mubr.bf16.gmra.mxu0 %v2268
      %v2325 = vpop.f32.mrf.mxu0
      %v2326 = vadd.f32 0.0, %v2325
      %v2327 = vpop.f32.mrf.mxu0
      %v2328 = vpop.f32.mrf.mxu0
      %v2329 = vadd.f32 0.0, %v2328
      %v2330 = vpop.f32.mrf.mxu0
      %2331 = vmatprep.mubr.bf16.mxu0 0
      %2332 = vmatmul.mubr.bf16.gmra.mxu0 %v2271
      %v2333 = vpop.f32.mrf.mxu0
      %v2334 = vadd.f32 0.0, %v2333
      %v2335 = vpop.f32.mrf.mxu0
      %v2336 = vpop.f32.mrf.mxu0
      %v2337 = vadd.f32 0.0, %v2336
      %v2338 = vpop.f32.mrf.mxu0
      %2339 = vmatprep.mubr.bf16.mxu0 0
      %2340 = vmatmul.mubr.bf16.gmra.mxu0 %v2274
      %v2341 = vpop.f32.mrf.mxu0
      %v2342 = vadd.f32 0.0, %v2341
      %v2343 = vpop.f32.mrf.mxu0
      %v2344 = vpop.f32.mrf.mxu0
      %v2345 = vadd.f32 0.0, %v2344
      %v2346 = vpop.f32.mrf.mxu0
      %2347 = vmatprep.mubr.bf16.mxu0 0
      %2348 = vmatmul.mubr.bf16.gmra.mxu0 %v2277
      %v2349 = vpop.f32.mrf.mxu0
      %v2350 = vadd.f32 0.0, %v2349
      %v2351 = vpop.f32.mrf.mxu0
      %v2352 = vpop.f32.mrf.mxu0
      %v2353 = vadd.f32 0.0, %v2352
      %v2354 = vpop.f32.mrf.mxu0
      %2355 = vmatprep.mubr.bf16.mxu0 0
      %2356 = vmatmul.mubr.bf16.gmra.mxu0 %v2280
      %v2357 = vpop.f32.mrf.mxu0
      %v2358 = vadd.f32 0.0, %v2357
      %v2359 = vpop.f32.mrf.mxu0
      %v2360 = vpop.f32.mrf.mxu0
      %v2361 = vadd.f32 0.0, %v2360
      %v2362 = vpop.f32.mrf.mxu0
      %2363 = vmatprep.mubr.bf16.mxu0 0
      %2364 = vmatmul.mubr.bf16.gmra.mxu0 %v2283
      %v2365 = vpop.f32.mrf.mxu0
      %v2366 = vadd.f32 0.0, %v2365
      %v2367 = vpop.f32.mrf.mxu0
      %v2368 = vpop.f32.mrf.mxu0
      %v2369 = vadd.f32 0.0, %v2368
      %v2370 = vpop.f32.mrf.mxu0
      %2371 = vmatprep.mubr.bf16.mxu0 0
      %2372 = vmatmul.mubr.bf16.gmra.mxu0 %v2286
      %v2373 = vpop.f32.mrf.mxu0
      %v2374 = vadd.f32 0.0, %v2373
      %v2375 = vpop.f32.mrf.mxu0
      %v2376 = vpop.f32.mrf.mxu0
      %v2377 = vadd.f32 0.0, %v2376
      %v2378 = vpop.f32.mrf.mxu0
      %2379 = vmatprep.mubr.bf16.mxu0 0
      %2380 = vmatmul.mubr.bf16.gmra.mxu0 %v2289
      %v2381 = vpop.f32.mrf.mxu0
      %v2382 = vadd.f32 0.0, %v2381
      %v2383 = vpop.f32.mrf.mxu0
      %v2384 = vpop.f32.mrf.mxu0
      %v2385 = vadd.f32 0.0, %v2384
      %v2386 = vpop.f32.mrf.mxu0
      %2387 = vdwg.mxu0
      %v2388 = vadd.f32 %v2002, %v2326
      %v2389 = vadd.f32 %v2003, %v2329
      %v2390 = vadd.f32 %v2004, %v2334
      %v2391 = vadd.f32 %v2005, %v2337
      %v2392 = vadd.f32 %v2006, %v2342
      %v2393 = vadd.f32 %v2007, %v2345
      %v2394 = vadd.f32 %v2008, %v2350
      %v2395 = vadd.f32 %v2009, %v2353
      %v2396 = vadd.f32 %v2010, %v2358
      %v2397 = vadd.f32 %v2011, %v2361
      %v2398 = vadd.f32 %v2012, %v2366
      %v2399 = vadd.f32 %v2013, %v2369
      %v2400 = vadd.f32 %v2014, %v2374
      %v2401 = vadd.f32 %v2015, %v2377
      %v2402 = vadd.f32 %v2016, %v2382
      %v2403 = vadd.f32 %v2017, %v2385
      %v2404 = vld [vmem:[%s1815] sm:$0xe]
      %v2405 = vld [vmem:[%s1815 + $0xc] sm:$0xe]
      %v2406 = vld [vmem:[%s1815 + $0x18] sm:$0xe]
      %v2407 = vld [vmem:[%s1815 + $0x24] sm:$0xe]
      %v2408 = vld [vmem:[%s1815 + $0x30] sm:$0xe]
      %v2409 = vld [vmem:[%s1815 + $0x3c] sm:$0xe]
      %v2410 = vld [vmem:[%s1815 + $0x48] sm:$0xe]
      %v2411 = vld [vmem:[%s1815 + $0x54] sm:$0xe]
      %v2436 = vrot.slane %v2404, 5
      %v2437 = vrot.slane %v2436, 4
      %v2438 = vrot.slane %v2019, 5
      %v2439 = vsel %vm741, %v2437, %v2438
      %v2440 = vrot.slane %v2438, 4
      %v2441 = vrot.slane %v2020, 5
      %v2442 = vsel %vm741, %v2440, %v2441
      %v2443 = vrot.slane %v2405, 5
      %v2444 = vrot.slane %v2443, 4
      %v2445 = vrot.slane %v2022, 5
      %v2446 = vsel %vm741, %v2444, %v2445
      %v2447 = vrot.slane %v2445, 4
      %v2448 = vrot.slane %v2023, 5
      %v2449 = vsel %vm741, %v2447, %v2448
      %v2450 = vrot.slane %v2406, 5
      %v2451 = vrot.slane %v2450, 4
      %v2452 = vrot.slane %v2025, 5
      %v2453 = vsel %vm741, %v2451, %v2452
      %v2454 = vrot.slane %v2452, 4
      %v2455 = vrot.slane %v2026, 5
      %v2456 = vsel %vm741, %v2454, %v2455
      %v2457 = vrot.slane %v2407, 5
      %v2458 = vrot.slane %v2457, 4
      %v2459 = vrot.slane %v2028, 5
      %v2460 = vsel %vm741, %v2458, %v2459
      %v2461 = vrot.slane %v2459, 4
      %v2462 = vrot.slane %v2029, 5
      %v2463 = vsel %vm741, %v2461, %v2462
      %v2464 = vrot.slane %v2408, 5
      %v2465 = vrot.slane %v2464, 4
      %v2466 = vrot.slane %v2031, 5
      %v2467 = vsel %vm741, %v2465, %v2466
      %v2468 = vrot.slane %v2466, 4
      %v2469 = vrot.slane %v2032, 5
      %v2470 = vsel %vm741, %v2468, %v2469
      %v2471 = vrot.slane %v2409, 5
      %v2472 = vrot.slane %v2471, 4
      %v2473 = vrot.slane %v2034, 5
      %v2474 = vsel %vm741, %v2472, %v2473
      %v2475 = vrot.slane %v2473, 4
      %v2476 = vrot.slane %v2035, 5
      %v2477 = vsel %vm741, %v2475, %v2476
      %v2478 = vrot.slane %v2410, 5
      %v2479 = vrot.slane %v2478, 4
      %v2480 = vrot.slane %v2037, 5
      %v2481 = vsel %vm741, %v2479, %v2480
      %v2482 = vrot.slane %v2480, 4
      %v2483 = vrot.slane %v2038, 5
      %v2484 = vsel %vm741, %v2482, %v2483
      %v2485 = vrot.slane %v2411, 5
      %v2486 = vrot.slane %v2485, 4
      %v2487 = vrot.slane %v2040, 5
      %v2488 = vsel %vm741, %v2486, %v2487
      %v2489 = vrot.slane %v2487, 4
      %v2490 = vrot.slane %v2041, 5
      %v2491 = vsel %vm741, %v2489, %v2490
      %s2492 = scalar_lea.vmem %s1, 64
      %v2493 = vld [vmem:[%s2492] sm:$0xf]
      %v2494 = vld [vmem:[%s2492 + $0x4] sm:$0xf]
      %v2495 = vunpack.c.l.b16 %v2439
      %v2496 = vunpack.c.l.b16 %v2442
      %v2497 = vunpack.c.l.b16 %v2446
      %v2498 = vunpack.c.l.b16 %v2449
      %v2499 = vunpack.c.l.b16 %v2453
      %v2500 = vunpack.c.l.b16 %v2456
      %v2501 = vunpack.c.l.b16 %v2460
      %v2502 = vunpack.c.l.b16 %v2463
      %v2503 = vunpack.c.l.b16 %v2467
      %v2504 = vunpack.c.l.b16 %v2470
      %v2505 = vunpack.c.l.b16 %v2474
      %v2506 = vunpack.c.l.b16 %v2477
      %v2507 = vunpack.c.l.b16 %v2481
      %v2508 = vunpack.c.l.b16 %v2484
      %v2509 = vunpack.c.l.b16 %v2488
      %v2510 = vunpack.c.l.b16 %v2491
      %v2511 = vpack.c.b16 %v2496, %v2495
      %v2512 = vpack.c.b16 %v2498, %v2497
      %v2513 = vpack.c.b16 %v2500, %v2499
      %v2514 = vpack.c.b16 %v2502, %v2501
      %v2515 = vpack.c.b16 %v2504, %v2503
      %v2516 = vpack.c.b16 %v2506, %v2505
      %v2517 = vpack.c.b16 %v2508, %v2507
      %v2518 = vpack.c.b16 %v2510, %v2509
      %v2521 = vunpack.c.l.b16 %v2493
      %v2522 = vunpack.c.l.b16 %v2494
      %v2523 = vpack.c.b16 %v2522, %v2521
      %v2526 = vsel %vm426, %v2511, 0
      %v2529 = vsel %vm426, %v2512, 0
      %v2532 = vsel %vm426, %v2513, 0
      %v2535 = vsel %vm426, %v2514, 0
      %v2538 = vsel %vm426, %v2515, 0
      %v2541 = vsel %vm426, %v2516, 0
      %v2544 = vsel %vm426, %v2517, 0
      %v2547 = vsel %vm426, %v2518, 0
      %2549 = vmatprep.subr.bf16.mxu0 0
      %2550 = vmatpush1.bf16.msra.mxu0 0
      %2551 = vmatprep.subr.bf16.mxu0 0
      %2552 = vmatpush1.bf16.msra.mxu0 0
      %2553 = vmatprep.subr.bf16.mxu0 0
      %2554 = vmatpush1.bf16.msra.mxu0 0
      %2555 = vmatprep.subr.bf16.mxu0 0
      %2556 = vmatpush1.bf16.msra.mxu0 0
      %2557 = vmatprep.subr.bf16.mxu0 0
      %2558 = vmatpush1.bf16.msra.mxu0 0
      %2559 = vmatprep.subr.bf16.mxu0 0
      %2560 = vmatpush1.bf16.msra.mxu0 0
      %2561 = vmatprep.subr.bf16.mxu0 0
      %2562 = vmatpush1.bf16.msra.mxu0 0
      %2563 = vmatprep.subr.bf16.mxu0 0
      %2564 = vmatpush1.bf16.msra.mxu0 %v2523
      %2565 = vmatprep.subr.bf16.mxu0 0
      %2566 = vmatpush2.bf16.msra.mxu0 0
      %2567 = vmatprep.subr.bf16.mxu0 0
      %2568 = vmatpush2.bf16.msra.mxu0 0
      %2569 = vmatprep.subr.bf16.mxu0 0
      %2570 = vmatpush2.bf16.msra.mxu0 0
      %2571 = vmatprep.subr.bf16.mxu0 0
      %2572 = vmatpush2.bf16.msra.mxu0 0
      %2573 = vmatprep.subr.bf16.mxu0 0
      %2574 = vmatpush2.bf16.msra.mxu0 0
      %2575 = vmatprep.subr.bf16.mxu0 0
      %2576 = vmatpush2.bf16.msra.mxu0 0
      %2577 = vmatprep.subr.bf16.mxu0 0
      %2578 = vmatpush2.bf16.msra.mxu0 0
      %2579 = vmatprep.subr.bf16.mxu0 0
      %2580 = vmatpush2.bf16.msra.mxu0 0
      %2581 = vmatprep.mubr.bf16.mxu0 0
      %2582 = vmatmul.mubr.bf16.gmra.mxu0 %v2526
      %v2583 = vpop.f32.mrf.mxu0
      %v2584 = vadd.f32 0.0, %v2583
      %v2585 = vpop.f32.mrf.mxu0
      %v2586 = vpop.f32.mrf.mxu0
      %v2587 = vadd.f32 0.0, %v2586
      %v2588 = vpop.f32.mrf.mxu0
      %2589 = vmatprep.mubr.bf16.mxu0 0
      %2590 = vmatmul.mubr.bf16.gmra.mxu0 %v2529
      %v2591 = vpop.f32.mrf.mxu0
      %v2592 = vadd.f32 0.0, %v2591
      %v2593 = vpop.f32.mrf.mxu0
      %v2594 = vpop.f32.mrf.mxu0
      %v2595 = vadd.f32 0.0, %v2594
      %v2596 = vpop.f32.mrf.mxu0
      %2597 = vmatprep.mubr.bf16.mxu0 0
      %2598 = vmatmul.mubr.bf16.gmra.mxu0 %v2532
      %v2599 = vpop.f32.mrf.mxu0
      %v2600 = vadd.f32 0.0, %v2599
      %v2601 = vpop.f32.mrf.mxu0
      %v2602 = vpop.f32.mrf.mxu0
      %v2603 = vadd.f32 0.0, %v2602
      %v2604 = vpop.f32.mrf.mxu0
      %2605 = vmatprep.mubr.bf16.mxu0 0
      %2606 = vmatmul.mubr.bf16.gmra.mxu0 %v2535
      %v2607 = vpop.f32.mrf.mxu0
      %v2608 = vadd.f32 0.0, %v2607
      %v2609 = vpop.f32.mrf.mxu0
      %v2610 = vpop.f32.mrf.mxu0
      %v2611 = vadd.f32 0.0, %v2610
      %v2612 = vpop.f32.mrf.mxu0
      %2613 = vmatprep.mubr.bf16.mxu0 0
      %2614 = vmatmul.mubr.bf16.gmra.mxu0 %v2538
      %v2615 = vpop.f32.mrf.mxu0
      %v2616 = vadd.f32 0.0, %v2615
      %v2617 = vpop.f32.mrf.mxu0
      %v2618 = vpop.f32.mrf.mxu0
      %v2619 = vadd.f32 0.0, %v2618
      %v2620 = vpop.f32.mrf.mxu0
      %2621 = vmatprep.mubr.bf16.mxu0 0
      %2622 = vmatmul.mubr.bf16.gmra.mxu0 %v2541
      %v2623 = vpop.f32.mrf.mxu0
      %v2624 = vadd.f32 0.0, %v2623
      %v2625 = vpop.f32.mrf.mxu0
      %v2626 = vpop.f32.mrf.mxu0
      %v2627 = vadd.f32 0.0, %v2626
      %v2628 = vpop.f32.mrf.mxu0
      %2629 = vmatprep.mubr.bf16.mxu0 0
      %2630 = vmatmul.mubr.bf16.gmra.mxu0 %v2544
      %v2631 = vpop.f32.mrf.mxu0
      %v2632 = vadd.f32 0.0, %v2631
      %v2633 = vpop.f32.mrf.mxu0
      %v2634 = vpop.f32.mrf.mxu0
      %v2635 = vadd.f32 0.0, %v2634
      %v2636 = vpop.f32.mrf.mxu0
      %2637 = vmatprep.mubr.bf16.mxu0 0
      %2638 = vmatmul.mubr.bf16.gmra.mxu0 %v2547
      %v2639 = vpop.f32.mrf.mxu0
      %v2640 = vadd.f32 0.0, %v2639
      %v2641 = vpop.f32.mrf.mxu0
      %v2642 = vpop.f32.mrf.mxu0
      %v2643 = vadd.f32 0.0, %v2642
      %v2644 = vpop.f32.mrf.mxu0
      %2645 = vdwg.mxu0
      %v2646 = vadd.f32 %v2388, %v2584
      %v2647 = vadd.f32 %v2389, %v2587
      %v2648 = vadd.f32 %v2390, %v2592
      %v2649 = vadd.f32 %v2391, %v2595
      %v2650 = vadd.f32 %v2392, %v2600
      %v2651 = vadd.f32 %v2393, %v2603
      %v2652 = vadd.f32 %v2394, %v2608
      %v2653 = vadd.f32 %v2395, %v2611
      %v2654 = vadd.f32 %v2396, %v2616
      %v2655 = vadd.f32 %v2397, %v2619
      %v2656 = vadd.f32 %v2398, %v2624
      %v2657 = vadd.f32 %v2399, %v2627
      %v2658 = vadd.f32 %v2400, %v2632
      %v2659 = vadd.f32 %v2401, %v2635
      %v2660 = vadd.f32 %v2402, %v2640
      %v2661 = vadd.f32 %v2403, %v2643
      %v2662 = vld [vmem:[%s2] sm:$0x1]
      %v2664 = vlaneseq
      %v2665 = vshrl.u32 %v2664, 7
      %v2666 = vsub.s32 0, %v2665
      %v2667 = vrot.slane %v2662, %v2666
      %v2669 = vadd.f32 %v2646, %v2667
      %v2670 = vadd.f32 %v2647, %v2667
      %v2671 = vadd.f32 %v2648, %v2667
      %v2672 = vadd.f32 %v2649, %v2667
      %v2673 = vadd.f32 %v2650, %v2667
      %v2674 = vadd.f32 %v2651, %v2667
      %v2675 = vadd.f32 %v2652, %v2667
      %v2676 = vadd.f32 %v2653, %v2667
      %v2677 = vadd.f32 %v2654, %v2667
      %v2678 = vadd.f32 %v2655, %v2667
      %v2679 = vadd.f32 %v2656, %v2667
      %v2680 = vadd.f32 %v2657, %v2667
      %v2681 = vadd.f32 %v2658, %v2667
      %v2682 = vadd.f32 %v2659, %v2667
      %v2683 = vadd.f32 %v2660, %v2667
      %v2684 = vadd.f32 %v2661, %v2667
      %vm2685 = vcmp.ge.f32.partialorder %v2669, 0.0
      %vm2686 = vcmp.ge.f32.partialorder %v2670, 0.0
      %vm2687 = vcmp.ge.f32.partialorder %v2671, 0.0
      %vm2688 = vcmp.ge.f32.partialorder %v2672, 0.0
      %vm2689 = vcmp.ge.f32.partialorder %v2673, 0.0
      %vm2690 = vcmp.ge.f32.partialorder %v2674, 0.0
      %vm2691 = vcmp.ge.f32.partialorder %v2675, 0.0
      %vm2692 = vcmp.ge.f32.partialorder %v2676, 0.0
      %vm2693 = vcmp.ge.f32.partialorder %v2677, 0.0
      %vm2694 = vcmp.ge.f32.partialorder %v2678, 0.0
      %vm2695 = vcmp.ge.f32.partialorder %v2679, 0.0
      %vm2696 = vcmp.ge.f32.partialorder %v2680, 0.0
      %vm2697 = vcmp.ge.f32.partialorder %v2681, 0.0
      %vm2698 = vcmp.ge.f32.partialorder %v2682, 0.0
      %vm2699 = vcmp.ge.f32.partialorder %v2683, 0.0
      %vm2700 = vcmp.ge.f32.partialorder %v2684, 0.0
      %v2701 = vmul.f32 %v2669, 0.01
      %v2702 = vmul.f32 %v2670, 0.01
      %v2703 = vmul.f32 %v2671, 0.01
      %v2704 = vmul.f32 %v2672, 0.01
      %v2705 = vmul.f32 %v2673, 0.01
      %v2706 = vmul.f32 %v2674, 0.01
      %v2707 = vmul.f32 %v2675, 0.01
      %v2708 = vmul.f32 %v2676, 0.01
      %v2709 = vmul.f32 %v2677, 0.01
      %v2710 = vmul.f32 %v2678, 0.01
      %v2711 = vmul.f32 %v2679, 0.01
      %v2712 = vmul.f32 %v2680, 0.01
      %v2713 = vmul.f32 %v2681, 0.01
      %v2714 = vmul.f32 %v2682, 0.01
      %v2715 = vmul.f32 %v2683, 0.01
      %v2716 = vmul.f32 %v2684, 0.01
      %v2717 = vsel %vm2685, %v2669, %v2701
      %v2718 = vsel %vm2686, %v2670, %v2702
      %v2719 = vsel %vm2687, %v2671, %v2703
      %v2720 = vsel %vm2688, %v2672, %v2704
      %v2721 = vsel %vm2689, %v2673, %v2705
      %v2722 = vsel %vm2690, %v2674, %v2706
      %v2723 = vsel %vm2691, %v2675, %v2707
      %v2724 = vsel %vm2692, %v2676, %v2708
      %v2725 = vsel %vm2693, %v2677, %v2709
      %v2726 = vsel %vm2694, %v2678, %v2710
      %v2727 = vsel %vm2695, %v2679, %v2711
      %v2728 = vsel %vm2696, %v2680, %v2712
      %v2729 = vsel %vm2697, %v2681, %v2713
      %v2730 = vsel %vm2698, %v2682, %v2714
      %v2731 = vsel %vm2699, %v2683, %v2715
      %v2732 = vsel %vm2700, %v2684, %v2716
      %v2733 = vpack.c.bf16 %v2718, %v2717
      %v2734 = vpack.c.bf16 %v2720, %v2719
      %v2735 = vpack.c.bf16 %v2722, %v2721
      %v2736 = vpack.c.bf16 %v2724, %v2723
      %v2737 = vpack.c.bf16 %v2726, %v2725
      %v2738 = vpack.c.bf16 %v2728, %v2727
      %v2739 = vpack.c.bf16 %v2730, %v2729
      %v2740 = vpack.c.bf16 %v2732, %v2731
      %v2749 = vunpack.c.l.b16 %v2733
      %v2750 = vunpack.c.h.b16 %v2733
      %v2751 = vunpack.c.l.b16 %v2734
      %v2752 = vunpack.c.h.b16 %v2734
      %v2753 = vunpack.c.l.b16 %v2735
      %v2754 = vunpack.c.h.b16 %v2735
      %v2755 = vunpack.c.l.b16 %v2736
      %v2756 = vunpack.c.h.b16 %v2736
      %v2757 = vunpack.c.l.b16 %v2737
      %v2758 = vunpack.c.h.b16 %v2737
      %v2759 = vunpack.c.l.b16 %v2738
      %v2760 = vunpack.c.h.b16 %v2738
      %v2761 = vunpack.c.l.b16 %v2739
      %v2762 = vunpack.c.h.b16 %v2739
      %v2763 = vunpack.c.l.b16 %v2740
      %v2764 = vunpack.c.h.b16 %v2740
      %v2765 = vpack.c.b16 %v2749, %v2749
      %v2766 = vpack.c.b16 %v2750, %v2750
      %v2767 = vpack.c.b16 %v2751, %v2751
      %v2768 = vpack.c.b16 %v2752, %v2752
      %v2769 = vpack.c.b16 %v2753, %v2753
      %v2770 = vpack.c.b16 %v2754, %v2754
      %v2771 = vpack.c.b16 %v2755, %v2755
      %v2772 = vpack.c.b16 %v2756, %v2756
      %v2773 = vpack.c.b16 %v2757, %v2757
      %v2774 = vpack.c.b16 %v2758, %v2758
      %v2775 = vpack.c.b16 %v2759, %v2759
      %v2776 = vpack.c.b16 %v2760, %v2760
      %v2777 = vpack.c.b16 %v2761, %v2761
      %v2778 = vpack.c.b16 %v2762, %v2762
      %v2779 = vpack.c.b16 %v2763, %v2763
      %v2780 = vpack.c.b16 %v2764, %v2764
      %vm2797 = vcmask 257024
      %2798 = vst.msk [vmem:[%s170] sm:$0xf] %vm2797, %v2765
      %2799 = vst.msk [vmem:[%s170 + $0x4] sm:$0xf] %vm2797, %v2766
      %2800 = vst.msk [vmem:[%s170 + $0x10] sm:$0xf] %vm2797, %v2767
      %2801 = vst.msk [vmem:[%s170 + $0x14] sm:$0xf] %vm2797, %v2768
      %2802 = vst.msk [vmem:[%s170 + $0x20] sm:$0xf] %vm2797, %v2769
      %2803 = vst.msk [vmem:[%s170 + $0x24] sm:$0xf] %vm2797, %v2770
      %2804 = vst.msk [vmem:[%s170 + $0x30] sm:$0xf] %vm2797, %v2771
      %2805 = vst.msk [vmem:[%s170 + $0x34] sm:$0xf] %vm2797, %v2772
      %2806 = vst.msk [vmem:[%s170 + $0x40] sm:$0xf] %vm2797, %v2773
      %2807 = vst.msk [vmem:[%s170 + $0x44] sm:$0xf] %vm2797, %v2774
      %2808 = vst.msk [vmem:[%s170 + $0x50] sm:$0xf] %vm2797, %v2775
      %2809 = vst.msk [vmem:[%s170 + $0x54] sm:$0xf] %vm2797, %v2776
      %2810 = vst.msk [vmem:[%s170 + $0x60] sm:$0xf] %vm2797, %v2777
      %2811 = vst.msk [vmem:[%s170 + $0x64] sm:$0xf] %vm2797, %v2778
      %2812 = vst.msk [vmem:[%s170 + $0x70] sm:$0xf] %vm2797, %v2779
      %2813 = vst.msk [vmem:[%s170 + $0x74] sm:$0xf] %vm2797, %v2780
      %2814 = vrot.lane.b32.xlu0 %v2765, 96
      %v2815 = vpop.permute.xlu0 %2814
      %2816 = vrot.lane.b32.xlu0 %v2766, 96
      %v2817 = vpop.permute.xlu0 %2816
      %2818 = vrot.lane.b32.xlu0 %v2767, 96
      %v2819 = vpop.permute.xlu0 %2818
      %2820 = vrot.lane.b32.xlu0 %v2768, 96
      %v2821 = vpop.permute.xlu0 %2820
      %2822 = vrot.lane.b32.xlu0 %v2769, 96
      %v2823 = vpop.permute.xlu0 %2822
      %2824 = vrot.lane.b32.xlu0 %v2770, 96
      %v2825 = vpop.permute.xlu0 %2824
      %2826 = vrot.lane.b32.xlu0 %v2771, 96
      %v2827 = vpop.permute.xlu0 %2826
      %2828 = vrot.lane.b32.xlu0 %v2772, 96
      %v2829 = vpop.permute.xlu0 %2828
      %2830 = vrot.lane.b32.xlu0 %v2773, 96
      %v2831 = vpop.permute.xlu0 %2830
      %2832 = vrot.lane.b32.xlu0 %v2774, 96
      %v2833 = vpop.permute.xlu0 %2832
      %2834 = vrot.lane.b32.xlu0 %v2775, 96
      %v2835 = vpop.permute.xlu0 %2834
      %2836 = vrot.lane.b32.xlu0 %v2776, 96
      %v2837 = vpop.permute.xlu0 %2836
      %2838 = vrot.lane.b32.xlu0 %v2777, 96
      %v2839 = vpop.permute.xlu0 %2838
      %2840 = vrot.lane.b32.xlu0 %v2778, 96
      %v2841 = vpop.permute.xlu0 %2840
      %2842 = vrot.lane.b32.xlu0 %v2779, 96
      %v2843 = vpop.permute.xlu0 %2842
      %2844 = vrot.lane.b32.xlu0 %v2780, 96
      %v2845 = vpop.permute.xlu0 %2844
      %s2862 = scalar_lea.vmem %s170, 8
      %2863 = vst.msk [vmem:[%s2862] sm:$0xf] %vm2797, %v2815
      %2864 = vst.msk [vmem:[%s2862 + $0x4] sm:$0xf] %vm2797, %v2817
      %2865 = vst.msk [vmem:[%s2862 + $0x10] sm:$0xf] %vm2797, %v2819
      %2866 = vst.msk [vmem:[%s2862 + $0x14] sm:$0xf] %vm2797, %v2821
      %2867 = vst.msk [vmem:[%s2862 + $0x20] sm:$0xf] %vm2797, %v2823
      %2868 = vst.msk [vmem:[%s2862 + $0x24] sm:$0xf] %vm2797, %v2825
      %2869 = vst.msk [vmem:[%s2862 + $0x30] sm:$0xf] %vm2797, %v2827
      %2870 = vst.msk [vmem:[%s2862 + $0x34] sm:$0xf] %vm2797, %v2829
      %2871 = vst.msk [vmem:[%s2862 + $0x40] sm:$0xf] %vm2797, %v2831
      %2872 = vst.msk [vmem:[%s2862 + $0x44] sm:$0xf] %vm2797, %v2833
      %2873 = vst.msk [vmem:[%s2862 + $0x50] sm:$0xf] %vm2797, %v2835
      %2874 = vst.msk [vmem:[%s2862 + $0x54] sm:$0xf] %vm2797, %v2837
      %2875 = vst.msk [vmem:[%s2862 + $0x60] sm:$0xf] %vm2797, %v2839
      %2876 = vst.msk [vmem:[%s2862 + $0x64] sm:$0xf] %vm2797, %v2841
      %2877 = vst.msk [vmem:[%s2862 + $0x70] sm:$0xf] %vm2797, %v2843
      %2878 = vst.msk [vmem:[%s2862 + $0x74] sm:$0xf] %vm2797, %v2845
      %p2879 = scmp.lt.s32.totalorder %s14, 3
      %s2880 = scalar_select %p2879, %s14, 3
      %s2881 = smul.addr %s2880, 32
      %s2882 = smul.addr %s2881, 4
      %s2883 = scalar_lea.vmem %s3, %s2882
      // Predicated region
      $region33: #{upsample_block_forward.1} parent=31 // pred_check
        %p2884 = pneg %p100
      $region34: #{upsample_block_forward.1} parent=31 // pred_check_branch
        %2886 = sbr.rel (%p2884) target = $region36
      $region35: #{upsample_block_forward.1} parent=31 // pred_region
        _
      $region36: #{upsample_block_forward.1} parent=31 // pred_fallthru
        _
    $region32: #{upsample_block_forward.1} parent=5 // pred_fallthru
      _
    %p2887 = scmp.le.s32.totalorder 2, %s9
    // Predicated region
    $region37: #{upsample_block_forward.1} parent=5 // pred_check
      %p2888 = pneg %p2887
    $region38: #{upsample_block_forward.1} parent=5 // pred_check_branch
      %2890 = sbr.rel (%p2888) target = $region40
    $region39: #{upsample_block_forward.1} parent=5 // pred_region
      %s2891 = ssub.s32 %s9, 2
      // Predicated region
      $region41: #{upsample_block_forward.1} parent=39 // pred_check
        %p2892 = pneg %p106
      $region42: #{upsample_block_forward.1} parent=39 // pred_check_branch
        %2894 = sbr.rel (%p2892) target = $region44
      $region43: #{upsample_block_forward.1} parent=39 // pred_region
        %p2895 = scmp.lt.s32.totalorder %s15, 3
        %s2896 = scalar_select %p2895, %s15, 3
        %s2897 = smul.addr %s2896, 32
        %s2898 = smul.addr %s2897, 4
        %s2899 = scalar_lea.vmem %s3, %s2898
      $region44: #{upsample_block_forward.1} parent=39 // pred_fallthru
        _
    $region40: #{upsample_block_forward.1} parent=5 // pred_fallthru
      _
  $region6: #{upsample_block_forward.1} parent=0 // loop_footer
    %s13 = sadd.s32 1, %s9
  $region7: #{upsample_block_forward.1} parent=0 // loop_footer_branch
    %8 = sbr.rel target = $region3
  $region8: #{upsample_block_forward.1} parent=0 // loop_exit
    _

</llo_original>
